<compile_context>
chip_gen: v5e
topology: v5e:2x2
jax: 0.10.0
libtpu: 0.0.40
codegen_flags: <defaults>
</compile_context>

<pallas_src>
import functools

import jax
import jax.numpy as jnp
from jax.experimental import pallas as pl
from jax.experimental.pallas import tpu as pltpu

_MIN_TM = 128
_MIN_TFF = 256


def _round_up(x, m):
    return (x + m - 1) // m * m


def _vmem_capacity_bytes():
    """Physical VMEM of the local chip; conservative 64 MiB if the query fails."""
    try:
        info = pltpu.get_tpu_info()
        cap = getattr(info, "vmem_capacity_bytes", None)
        if cap:
            return int(cap)
    except Exception:
        pass
    return 64 * 2**20


def _ffn_kernel(x_ref, w1_ref, b1_ref, w2_ref, b2_ref, o_ref, acc_ref, *,
                gelu_approx):
    """One (row-tile, d_ff-tile) step of w2(gelu(w1(x)+b1)) + b2."""
    k = pl.program_id(1)

    # First matmul on this d_ff tile: operands stay in their native dtype
    # (bf16 feeds the MXU at full rate); accumulate in f32.
    h = jnp.dot(x_ref[...], w1_ref[...], preferred_element_type=jnp.float32)
    h = h + b1_ref[...].astype(jnp.float32)
    # approximate=True (tanh) routes through the EUP; approximate=False is the
    # exact erf GELU (parity with nn.GELU() default) if tolerance requires it.
    h = jax.nn.gelu(h, approximate=gelu_approx)
    # Dropout == identity (eval mode).

    # Second matmul: partial (tm, d_model) product, f32 accumulation.
    part = jnp.dot(h.astype(w2_ref.dtype), w2_ref[...],
                   preferred_element_type=jnp.float32)

    # Seed the accumulator with the first partial product (no zero+add pass).
    @pl.when(k == 0)
    def _seed():
        acc_ref[...] = part

    @pl.when(k > 0)
    def _accum():
        acc_ref[...] += part

    @pl.when(k == pl.num_programs(1) - 1)
    def _finalize():
        o_ref[...] = (acc_ref[...] + b2_ref[...].astype(jnp.float32)
                      ).astype(o_ref.dtype)


def _pspec(shape, index_map, single_buffer):
    if single_buffer:
        # Blocks that are either constant-index-resident or written once per
        # row chunk don't need double-buffering.
        return pl.BlockSpec(shape, index_map, pipeline_mode=pl.Buffered(1))
    return pl.BlockSpec(shape, index_map)


@functools.partial(
    jax.jit,
    static_argnames=("block_rows", "block_ff", "compute_dtype", "gelu_approx",
                     "single_buffer_params", "vmem_cap"),
)
def _chunked_ffn(x, w1, b1, w2, b2, *, block_rows, block_ff, compute_dtype,
                 gelu_approx, single_buffer_params, vmem_cap):
    B, S, d_model = x.shape
    d_ff = w1.shape[1]
    out_dtype = x.dtype
    M = B * S

    cdtype = jnp.dtype(compute_dtype)
    csz = cdtype.itemsize
    osz = jnp.dtype(out_dtype).itemsize

    # --- Tiling (VMEM-capacity aware) ---------------------------------------
    dm_p = _round_up(d_model, 128)               # lane-dense output stores
    budget = max(24 * 2**20, vmem_cap - 16 * 2**20)   # headroom for scratch
    row_align = 128                              # full MXU rows on all chips

    tm = min(_round_up(block_rows, row_align), _round_up(M, row_align))

    def vmem_est(tm_, tff_):
        ff_chunks_ = pl.cdiv(d_ff, tff_)
        w_bufs = 1 if (single_buffer_params and ff_chunks_ == 1) else 2
        o_bufs = 1 if (single_buffer_params and ff_chunks_ > 1) else 2
        return (2 * tm_ * dm_p * csz                 # x tile (double-buffered)
                + o_bufs * tm_ * dm_p * osz          # out tile
                + w_bufs * 2 * dm_p * tff_ * csz     # W1 + W2 tiles
                + w_bufs * (tff_ + dm_p) * 4         # biases (f32)
                + tm_ * dm_p * 4                     # f32 accumulator scratch
                + tm_ * tff_ * 4)                    # f32 intermediate h

    # Prefer fully resident weights (single DMA, single-buffered) when they fit.
    tff_full = _round_up(d_ff, 128)
    tff = tff_full
    if vmem_est(tm, tff) > budget:
        tff = min(tff_full, _round_up(block_ff, 128))
    # Shrink the d_ff tile first (weights dominate), then the row tile.
    while vmem_est(tm, tff) > budget and (tff > _MIN_TFF or tm > _MIN_TM):
        if tff > _MIN_TFF:
            tff = max(_MIN_TFF, _round_up(tff // 2, 128))
        else:
            tm = max(_MIN_TM, _round_up(tm // 2, row_align))

    ff_chunks = pl.cdiv(d_ff, tff)
    dff_p = ff_chunks * tff                      # zero-padded d_ff

    # Megacore: when the weights are resident (no re-streaming cost), split the
    # row axis so the "parallel" grid axis has >= 2 steps for 2-TC chips (v7x).
    row_chunks = pl.cdiv(M, tm)
    if row_chunks == 1 and ff_chunks == 1 and M > row_align:
        tm = max(row_align, _round_up((M + 1) // 2, row_align))
        row_chunks = pl.cdiv(M, tm)
    M_pad = row_chunks * tm

    resident_params = single_buffer_params and ff_chunks == 1
    out_single = single_buffer_params and ff_chunks > 1

    # --- Wrapper-side zero padding (no numeric effect) -----------------------
    x2d = x.reshape(M, d_model).astype(cdtype)
    w1c = w1.astype(cdtype)
    w2c = w2.astype(cdtype)
    b1p = b1.astype(jnp.float32)
    b2p = b2.astype(jnp.float32)

    if M_pad != M:
        x2d = jnp.pad(x2d, ((0, M_pad - M), (0, 0)))
    if dm_p != d_model:
        x2d = jnp.pad(x2d, ((0, 0), (0, dm_p - d_model)))
        w1c = jnp.pad(w1c, ((0, dm_p - d_model), (0, 0)))
        w2c = jnp.pad(w2c, ((0, 0), (0, dm_p - d_model)))
        b2p = jnp.pad(b2p, (0, dm_p - d_model))
    if dff_p != d_ff:
        w1c = jnp.pad(w1c, ((0, 0), (0, dff_p - d_ff)))
        w2c = jnp.pad(w2c, ((0, dff_p - d_ff), (0, 0)))
        b1p = jnp.pad(b1p, (0, dff_p - d_ff))
    b1_2d = b1p.reshape(1, dff_p)
    b2_2d = b2p.reshape(1, dm_p)

    # --- VMEM limit / cost hint ----------------------------------------------
    vmem_est_final = vmem_est(tm, tff)
    vmem_limit = int(min(max(vmem_cap - 8 * 2**20, 32 * 2**20),
                         max(32 * 2**20, vmem_est_final + 8 * 2**20)))

    weight_bytes = (w1c.size + w2c.size) * csz
    if ff_chunks > 1:
        weight_bytes *= row_chunks               # weights re-streamed per row chunk
    cost = pl.CostEstimate(
        flops=4 * M_pad * dm_p * dff_p,          # two matmuls
        transcendentals=M_pad * dff_p,           # GELU per hidden element
        bytes_accessed=int(x2d.size * csz + M_pad * dm_p * osz
                           + weight_bytes + (dff_p + dm_p) * 4),
    )

    kernel = functools.partial(_ffn_kernel, gelu_approx=gelu_approx)

    out = pl.pallas_call(
        kernel,
        out_shape=jax.ShapeDtypeStruct((M_pad, dm_p), out_dtype),
        grid_spec=pltpu.PrefetchScalarGridSpec(
            num_scalar_prefetch=0,
            grid=(row_chunks, ff_chunks),        # reduction (d_ff) axis last
            in_specs=[
                pl.BlockSpec((tm, dm_p), lambda i, k: (i, 0)),              # x rows
                _pspec((dm_p, tff), lambda i, k: (0, k), resident_params),  # W1
                _pspec((1, tff), lambda i, k: (0, k), resident_params),     # b1
                _pspec((tff, dm_p), lambda i, k: (k, 0), resident_params),  # W2
                _pspec((1, dm_p), lambda i, k: (0, 0), single_buffer_params),  # b2
            ],
            out_specs=_pspec((tm, dm_p), lambda i, k: (i, 0), out_single),
            scratch_shapes=[pltpu.VMEM((tm, dm_p), jnp.float32)],
        ),
        compiler_params=pltpu.CompilerParams(
            dimension_semantics=("parallel", "arbitrary"),
            vmem_limit_bytes=vmem_limit,
        ),
        cost_estimate=cost,
    )(x2d, w1c, b1_2d, w2c, b2_2d)

    return out[:M, :d_model].reshape(B, S, d_model)


def chunked_feed_forward(x, w1, b1, w2, b2, *, block_rows=768, block_ff=2048,
                         compute_dtype="auto", gelu_approx=True):
    """FFN y = w_2(dropout(gelu(w_1(x)))), dropout = identity (eval mode).

    x: [B, S, d_model]; w1: [d_model, d_ff] (= W1^T of nn.Linear), b1: [d_ff],
    w2: [d_ff, d_model] (= W2^T), b2: [d_model].
    """
    if compute_dtype == "auto":
        # bf16 operands feed the MXU at full rate on v6e/v7x; accumulation is f32.
        cdtype = jnp.bfloat16 if x.dtype == jnp.float32 else x.dtype
    elif compute_dtype is None:
        cdtype = x.dtype
    else:
        cdtype = jnp.dtype(compute_dtype)

    vmem_cap = _vmem_capacity_bytes()

    # Retry ladder: if a configuration fails to compile / allocate, retry with
    # SMALLER tiles (that is what actually recovers from VMEM pressure) and
    # drop the single-buffered-parameter request.
    attempts = (
        dict(block_rows=block_rows, block_ff=block_ff, single_buffer_params=True),
        dict(block_rows=max(128, block_rows // 2),
             block_ff=max(256, block_ff // 2), single_buffer_params=False),
        dict(block_rows=128, block_ff=256, single_buffer_params=False),
    )
    last_err = None
    for a in attempts:
        try:
            return _chunked_ffn(x, w1, b1, w2, b2, compute_dtype=cdtype,
                                gelu_approx=gelu_approx, vmem_cap=vmem_cap, **a)
        except Exception as e:  # compile / VMEM-allocation failure
            last_err = e
    raise last_err


def _reference(x, w1, b1, w2, b2, *, approximate):
    h = jax.nn.gelu(x @ w1 + b1, approximate=approximate)
    return h @ w2 + b2


if __name__ == "__main__":
    # Small shapes consistent with the module's forward:
    # x: [batch=2, seq=64, d_model=32], d_ff=64.
    B, S, d_model, d_ff = 2, 64, 32, 64

    key = jax.random.PRNGKey(0)
    kx, k1, k2, k3, k4 = jax.random.split(key, 5)

    x = jax.random.normal(kx, (B, S, d_model), dtype=jnp.float32)

    # Deterministic parameter init (nn.Linear-style uniform bounds); weights
    # stored already transposed relative to nn.Linear.weight (w1 == W1^T).
    bound1 = 1.0 / (d_model ** 0.5)
    bound2 = 1.0 / (d_ff ** 0.5)
    w1 = jax.random.uniform(k1, (d_model, d_ff), jnp.float32, -bound1, bound1)
    b1 = jax.random.uniform(k2, (d_ff,), jnp.float32, -bound1, bound1)
    w2 = jax.random.uniform(k3, (d_ff, d_model), jnp.float32, -bound2, bound2)
    b2 = jax.random.uniform(k4, (d_model,), jnp.float32, -bound2, bound2)

    # References: exact erf GELU (nn.GELU() default, PyTorch parity) and tanh.
    y_exact = _reference(x, w1, b1, w2, b2, approximate=False)
    y_tanh = _reference(x, w1, b1, w2, b2, approximate=True)

    # f32-operand path (multi-pass MXU emulation), tanh GELU.
    y_f32 = jax.block_until_ready(
        chunked_feed_forward(x, w1, b1, w2, b2, compute_dtype=jnp.float32))
    assert y_f32.shape == (B, S, d_model)
    assert jnp.allclose(y_f32, y_tanh, atol=1e-2, rtol=1e-2), "f32 mismatch vs reference"
    # tanh vs. exact-erf GELU differ by < 1e-2 at these magnitudes.
    assert jnp.allclose(y_f32, y_exact, atol=2e-2, rtol=2e-2), "f32 mismatch vs erf reference"

    # Default fast path: bf16 operands into the MXU, f32 accumulation.
    y = jax.block_until_ready(chunked_feed_forward(x, w1, b1, w2, b2))
    assert y.shape == (B, S, d_model)
    assert jnp.allclose(y, y_exact, atol=5e-2, rtol=5e-2), "bf16 mismatch vs reference"

    print("KERNEL_OK")
</pallas_src>

<mosaic_0001>
module attributes {stable_mosaic.version = 11 : i64} {
  func.func @_ffn_kernel(%arg0: i32, %arg1: i32, %arg2: memref<128x128xf32, #tpu.memory_space<vmem>>, %arg3: memref<128x128xf32, #tpu.memory_space<vmem>>, %arg4: memref<1x128xf32, #tpu.memory_space<vmem>>, %arg5: memref<128x128xf32, #tpu.memory_space<vmem>>, %arg6: memref<1x128xf32, #tpu.memory_space<vmem>>, %arg7: memref<128x128xf32, #tpu.memory_space<vmem>>, %arg8: memref<128x128xf32, #tpu.memory_space<vmem>>) attributes {dimension_semantics = [#tpu.dimension_semantics<parallel>, #tpu.dimension_semantics<arbitrary>], iteration_bounds = array<i64: 1, 1>, scalar_prefetch = 0 : i64, scratch_operands = 1 : i64, tpu.core_type = #tpu.core_type<tc>, window_params = [{transform_indices = @transform_0, window_bounds = array<i64: 128, 128>}, {pipeline_mode = #tpu.pipeline_mode<synchronous>, transform_indices = @transform_1, window_bounds = array<i64: 128, 128>}, {pipeline_mode = #tpu.pipeline_mode<synchronous>, transform_indices = @transform_2, window_bounds = array<i64: 1, 128>}, {pipeline_mode = #tpu.pipeline_mode<synchronous>, transform_indices = @transform_3, window_bounds = array<i64: 128, 128>}, {pipeline_mode = #tpu.pipeline_mode<synchronous>, transform_indices = @transform_4, window_bounds = array<i64: 1, 128>}, {transform_indices = @transform_5, window_bounds = array<i64: 128, 128>}]} {
    %c0 = arith.constant 0 : index
    %c0_0 = arith.constant 0 : index
    %0 = vector.load %arg2[%c0, %c0_0] : memref<128x128xf32, #tpu.memory_space<vmem>>, vector<128x128xf32>
    %c0_1 = arith.constant 0 : index
    %c0_2 = arith.constant 0 : index
    %1 = vector.load %arg3[%c0_1, %c0_2] : memref<128x128xf32, #tpu.memory_space<vmem>>, vector<128x128xf32>
    %cst = arith.constant dense<0.000000e+00> : vector<128x128xf32>
    %2 = tpu.matmul %0, %1, %cst {dimension_numbers = #tpu.dot_dimension_numbers<[1], [0], [0], [1], [0, 0, 1, 1], [], []>} : vector<128x128xf32>, vector<128x128xf32>, vector<128x128xf32> -> vector<128x128xf32>
    %c0_3 = arith.constant 0 : index
    %c0_4 = arith.constant 0 : index
    %3 = vector.load %arg4[%c0_3, %c0_4] : memref<1x128xf32, #tpu.memory_space<vmem>>, vector<1x128xf32>
    %4 = vector.broadcast %3 : vector<1x128xf32> to vector<128x128xf32>
    %5 = arith.addf %2, %4 : vector<128x128xf32>
    %6 = arith.mulf %5, %5 : vector<128x128xf32>
    %7 = arith.mulf %5, %6 : vector<128x128xf32>
    %cst_5 = arith.constant 4.471500e-02 : f32
    %8 = vector.broadcast %cst_5 : f32 to vector<128x128xf32>
    %9 = arith.mulf %8, %7 : vector<128x128xf32>
    %10 = arith.addf %5, %9 : vector<128x128xf32>
    %cst_6 = arith.constant 0.797884583 : f32
    %11 = vector.broadcast %cst_6 : f32 to vector<128x128xf32>
    %12 = arith.mulf %11, %10 : vector<128x128xf32>
    %13 = math.tanh %12 : vector<128x128xf32>
    %cst_7 = arith.constant 1.000000e+00 : f32
    %14 = vector.broadcast %cst_7 : f32 to vector<128x128xf32>
    %15 = arith.addf %14, %13 : vector<128x128xf32>
    %cst_8 = arith.constant 5.000000e-01 : f32
    %16 = vector.broadcast %cst_8 : f32 to vector<128x128xf32>
    %17 = arith.mulf %16, %15 : vector<128x128xf32>
    %18 = arith.mulf %5, %17 : vector<128x128xf32>
    %c0_9 = arith.constant 0 : index
    %c0_10 = arith.constant 0 : index
    %19 = vector.load %arg5[%c0_9, %c0_10] : memref<128x128xf32, #tpu.memory_space<vmem>>, vector<128x128xf32>
    %cst_11 = arith.constant dense<0.000000e+00> : vector<128x128xf32>
    %20 = tpu.matmul %18, %19, %cst_11 {dimension_numbers = #tpu.dot_dimension_numbers<[1], [0], [0], [1], [0, 0, 1, 1], [], []>} : vector<128x128xf32>, vector<128x128xf32>, vector<128x128xf32> -> vector<128x128xf32>
    %c0_i32 = arith.constant 0 : i32
    %21 = arith.cmpi eq, %arg1, %c0_i32 : i32
    %22 = arith.extui %21 : i1 to i32
    %c0_i32_12 = arith.constant 0 : i32
    %23 = arith.cmpi ne, %22, %c0_i32_12 : i32
    scf.if %23 {
      %c0_17 = arith.constant 0 : index
      %c0_18 = arith.constant 0 : index
      %30 = vector.load %arg8[%c0_17, %c0_18] : memref<128x128xf32, #tpu.memory_space<vmem>>, vector<128x128xf32>
      tpu.vector_store %arg8[%c0_17, %c0_18], %20 {strides = array<i32>} : memref<128x128xf32, #tpu.memory_space<vmem>>, vector<128x128xf32>,
    } else {
    }
    %c0_i32_13 = arith.constant 0 : i32
    %24 = arith.cmpi sgt, %arg1, %c0_i32_13 : i32
    %25 = arith.extui %24 : i1 to i32
    %c0_i32_14 = arith.constant 0 : i32
    %26 = arith.cmpi ne, %25, %c0_i32_14 : i32
    scf.if %26 {
      %c0_17 = arith.constant 0 : index
      %c0_18 = arith.constant 0 : index
      %30 = vector.load %arg8[%c0_17, %c0_18] : memref<128x128xf32, #tpu.memory_space<vmem>>, vector<128x128xf32>
      %31 = arith.addf %30, %20 : vector<128x128xf32>
      %c0_19 = arith.constant 0 : index
      %c0_20 = arith.constant 0 : index
      %32 = vector.load %arg8[%c0_19, %c0_20] : memref<128x128xf32, #tpu.memory_space<vmem>>, vector<128x128xf32>
      tpu.vector_store %arg8[%c0_19, %c0_20], %31 {strides = array<i32>} : memref<128x128xf32, #tpu.memory_space<vmem>>, vector<128x128xf32>,
    } else {
    }
    %c0_i32_15 = arith.constant 0 : i32
    %27 = arith.cmpi eq, %arg1, %c0_i32_15 : i32
    %28 = arith.extui %27 : i1 to i32
    %c0_i32_16 = arith.constant 0 : i32
    %29 = arith.cmpi ne, %28, %c0_i32_16 : i32
    scf.if %29 {
      %c0_17 = arith.constant 0 : index
      %c0_18 = arith.constant 0 : index
      %30 = vector.load %arg8[%c0_17, %c0_18] : memref<128x128xf32, #tpu.memory_space<vmem>>, vector<128x128xf32>
      %c0_19 = arith.constant 0 : index
      %c0_20 = arith.constant 0 : index
      %31 = vector.load %arg6[%c0_19, %c0_20] : memref<1x128xf32, #tpu.memory_space<vmem>>, vector<1x128xf32>
      %32 = vector.broadcast %31 : vector<1x128xf32> to vector<128x128xf32>
      %33 = arith.addf %30, %32 : vector<128x128xf32>
      %c0_21 = arith.constant 0 : index
      %c0_22 = arith.constant 0 : index
      %34 = vector.load %arg7[%c0_21, %c0_22] : memref<128x128xf32, #tpu.memory_space<vmem>>, vector<128x128xf32>
      tpu.vector_store %arg7[%c0_21, %c0_22], %33 {strides = array<i32>} : memref<128x128xf32, #tpu.memory_space<vmem>>, vector<128x128xf32>,
    } else {
    }
    return
  }
  func.func @transform_0(%arg0: i32, %arg1: i32) -> (i32, i32) {
    %c0_i32 = arith.constant 0 : i32
    %c0_i32_0 = arith.constant 0 : i32
    return %arg0, %c0_i32 : i32, i32
  }
  func.func @transform_1(%arg0: i32, %arg1: i32) -> (i32, i32) {
    %c0_i32 = arith.constant 0 : i32
    %c0_i32_0 = arith.constant 0 : i32
    return %c0_i32, %arg1 : i32, i32
  }
  func.func @transform_2(%arg0: i32, %arg1: i32) -> (i32, i32) {
    %c0_i32 = arith.constant 0 : i32
    %c0_i32_0 = arith.constant 0 : i32
    return %c0_i32, %arg1 : i32, i32
  }
  func.func @transform_3(%arg0: i32, %arg1: i32) -> (i32, i32) {
    %c0_i32 = arith.constant 0 : i32
    %c0_i32_0 = arith.constant 0 : i32
    return %arg1, %c0_i32 : i32, i32
  }
  func.func @transform_4(%arg0: i32, %arg1: i32) -> (i32, i32) {
    %c0_i32 = arith.constant 0 : i32
    %c0_i32_0 = arith.constant 0 : i32
    %c0_i32_1 = arith.constant 0 : i32
    return %c0_i32, %c0_i32_0 : i32, i32
  }
  func.func @transform_5(%arg0: i32, %arg1: i32) -> (i32, i32) {
    %c0_i32 = arith.constant 0 : i32
    %c0_i32_0 = arith.constant 0 : i32
    return %arg0, %c0_i32 : i32, i32
  }
}

module attributes {stable_mosaic.version = 11 : i64} {
  func.func @_ffn_kernel(%arg0: i32, %arg1: i32, %arg2: memref<128x128xf32, #tpu.memory_space<vmem>>, %arg3: memref<128x128xf32, #tpu.memory_space<vmem>>, %arg4: memref<1x128xf32, #tpu.memory_space<vmem>>, %arg5: memref<128x128xf32, #tpu.memory_space<vmem>>, %arg6: memref<1x128xf32, #tpu.memory_space<vmem>>, %arg7: memref<128x128xf32, #tpu.memory_space<vmem>>, %arg8: memref<128x128xf32, #tpu.memory_space<vmem>>) attributes {dimension_semantics = [#tpu.dimension_semantics<parallel>, #tpu.dimension_semantics<arbitrary>], iteration_bounds = array<i64: 1, 1>, scalar_prefetch = 0 : i64, scratch_operands = 1 : i64, tpu.core_type = #tpu.core_type<tc>, window_params = [{transform_indices = @transform_0, window_bounds = array<i64: 128, 128>}, {transform_indices = @transform_1, window_bounds = array<i64: 128, 128>}, {transform_indices = @transform_2, window_bounds = array<i64: 1, 128>}, {transform_indices = @transform_3, window_bounds = array<i64: 128, 128>}, {pipeline_mode = #tpu.pipeline_mode<synchronous>, transform_indices = @transform_4, window_bounds = array<i64: 1, 128>}, {transform_indices = @transform_5, window_bounds = array<i64: 128, 128>}]} {
    %c0 = arith.constant 0 : index
    %c0_0 = arith.constant 0 : index
    %0 = vector.load %arg2[%c0, %c0_0] : memref<128x128xf32, #tpu.memory_space<vmem>>, vector<128x128xf32>
    %c0_1 = arith.constant 0 : index
    %c0_2 = arith.constant 0 : index
    %1 = vector.load %arg3[%c0_1, %c0_2] : memref<128x128xf32, #tpu.memory_space<vmem>>, vector<128x128xf32>
    %cst = arith.constant dense<0.000000e+00> : vector<128x128xf32>
    %2 = tpu.matmul %0, %1, %cst {dimension_numbers = #tpu.dot_dimension_numbers<[1], [0], [0], [1], [0, 0, 1, 1], [], []>} : vector<128x128xf32>, vector<128x128xf32>, vector<128x128xf32> -> vector<128x128xf32>
    %c0_3 = arith.constant 0 : index
    %c0_4 = arith.constant 0 : index
    %3 = vector.load %arg4[%c0_3, %c0_4] : memref<1x128xf32, #tpu.memory_space<vmem>>, vector<1x128xf32>
    %4 = vector.broadcast %3 : vector<1x128xf32> to vector<128x128xf32>
    %5 = arith.addf %2, %4 : vector<128x128xf32>
    %6 = arith.mulf %5, %5 : vector<128x128xf32>
    %7 = arith.mulf %5, %6 : vector<128x128xf32>
    %cst_5 = arith.constant 4.471500e-02 : f32
    %8 = vector.broadcast %cst_5 : f32 to vector<128x128xf32>
    %9 = arith.mulf %8, %7 : vector<128x128xf32>
    %10 = arith.addf %5, %9 : vector<128x128xf32>
    %cst_6 = arith.constant 0.797884583 : f32
    %11 = vector.broadcast %cst_6 : f32 to vector<128x128xf32>
    %12 = arith.mulf %11, %10 : vector<128x128xf32>
    %13 = math.tanh %12 : vector<128x128xf32>
    %cst_7 = arith.constant 1.000000e+00 : f32
    %14 = vector.broadcast %cst_7 : f32 to vector<128x128xf32>
    %15 = arith.addf %14, %13 : vector<128x128xf32>
    %cst_8 = arith.constant 5.000000e-01 : f32
    %16 = vector.broadcast %cst_8 : f32 to vector<128x128xf32>
    %17 = arith.mulf %16, %15 : vector<128x128xf32>
    %18 = arith.mulf %5, %17 : vector<128x128xf32>
    %c0_9 = arith.constant 0 : index
    %c0_10 = arith.constant 0 : index
    %19 = vector.load %arg5[%c0_9, %c0_10] : memref<128x128xf32, #tpu.memory_space<vmem>>, vector<128x128xf32>
    %cst_11 = arith.constant dense<0.000000e+00> : vector<128x128xf32>
    %20 = tpu.matmul %18, %19, %cst_11 {dimension_numbers = #tpu.dot_dimension_numbers<[1], [0], [0], [1], [0, 0, 1, 1], [], []>} : vector<128x128xf32>, vector<128x128xf32>, vector<128x128xf32> -> vector<128x128xf32>
    %c0_i32 = arith.constant 0 : i32
    %21 = arith.cmpi eq, %arg1, %c0_i32 : i32
    %22 = arith.extui %21 : i1 to i32
    %c0_i32_12 = arith.constant 0 : i32
    %23 = arith.cmpi ne, %22, %c0_i32_12 : i32
    scf.if %23 {
      %c0_17 = arith.constant 0 : index
      %c0_18 = arith.constant 0 : index
      %30 = vector.load %arg8[%c0_17, %c0_18] : memref<128x128xf32, #tpu.memory_space<vmem>>, vector<128x128xf32>
      tpu.vector_store %arg8[%c0_17, %c0_18], %20 {strides = array<i32>} : memref<128x128xf32, #tpu.memory_space<vmem>>, vector<128x128xf32>,
    } else {
    }
    %c0_i32_13 = arith.constant 0 : i32
    %24 = arith.cmpi sgt, %arg1, %c0_i32_13 : i32
    %25 = arith.extui %24 : i1 to i32
    %c0_i32_14 = arith.constant 0 : i32
    %26 = arith.cmpi ne, %25, %c0_i32_14 : i32
    scf.if %26 {
      %c0_17 = arith.constant 0 : index
      %c0_18 = arith.constant 0 : index
      %30 = vector.load %arg8[%c0_17, %c0_18] : memref<128x128xf32, #tpu.memory_space<vmem>>, vector<128x128xf32>
      %31 = arith.addf %30, %20 : vector<128x128xf32>
      %c0_19 = arith.constant 0 : index
      %c0_20 = arith.constant 0 : index
      %32 = vector.load %arg8[%c0_19, %c0_20] : memref<128x128xf32, #tpu.memory_space<vmem>>, vector<128x128xf32>
      tpu.vector_store %arg8[%c0_19, %c0_20], %31 {strides = array<i32>} : memref<128x128xf32, #tpu.memory_space<vmem>>, vector<128x128xf32>,
    } else {
    }
    %c0_i32_15 = arith.constant 0 : i32
    %27 = arith.cmpi eq, %arg1, %c0_i32_15 : i32
    %28 = arith.extui %27 : i1 to i32
    %c0_i32_16 = arith.constant 0 : i32
    %29 = arith.cmpi ne, %28, %c0_i32_16 : i32
    scf.if %29 {
      %c0_17 = arith.constant 0 : index
      %c0_18 = arith.constant 0 : index
      %30 = vector.load %arg8[%c0_17, %c0_18] : memref<128x128xf32, #tpu.memory_space<vmem>>, vector<128x128xf32>
      %c0_19 = arith.constant 0 : index
      %c0_20 = arith.constant 0 : index
      %31 = vector.load %arg6[%c0_19, %c0_20] : memref<1x128xf32, #tpu.memory_space<vmem>>, vector<1x128xf32>
      %32 = vector.broadcast %31 : vector<1x128xf32> to vector<128x128xf32>
      %33 = arith.addf %30, %32 : vector<128x128xf32>
      %c0_21 = arith.constant 0 : index
      %c0_22 = arith.constant 0 : index
      %34 = vector.load %arg7[%c0_21, %c0_22] : memref<128x128xf32, #tpu.memory_space<vmem>>, vector<128x128xf32>
      tpu.vector_store %arg7[%c0_21, %c0_22], %33 {strides = array<i32>} : memref<128x128xf32, #tpu.memory_space<vmem>>, vector<128x128xf32>,
    } else {
    }
    return
  }
  func.func @transform_0(%arg0: i32, %arg1: i32) -> (i32, i32) {
    %c0_i32 = arith.constant 0 : i32
    %c0_i32_0 = arith.constant 0 : i32
    return %arg0, %c0_i32 : i32, i32
  }
  func.func @transform_1(%arg0: i32, %arg1: i32) -> (i32, i32) {
    %c0_i32 = arith.constant 0 : i32
    %c0_i32_0 = arith.constant 0 : i32
    return %c0_i32, %arg1 : i32, i32
  }
  func.func @transform_2(%arg0: i32, %arg1: i32) -> (i32, i32) {
    %c0_i32 = arith.constant 0 : i32
    %c0_i32_0 = arith.constant 0 : i32
    return %c0_i32, %arg1 : i32, i32
  }
  func.func @transform_3(%arg0: i32, %arg1: i32) -> (i32, i32) {
    %c0_i32 = arith.constant 0 : i32
    %c0_i32_0 = arith.constant 0 : i32
    return %arg1, %c0_i32 : i32, i32
  }
  func.func @transform_4(%arg0: i32, %arg1: i32) -> (i32, i32) {
    %c0_i32 = arith.constant 0 : i32
    %c0_i32_0 = arith.constant 0 : i32
    %c0_i32_1 = arith.constant 0 : i32
    return %c0_i32, %c0_i32_0 : i32, i32
  }
  func.func @transform_5(%arg0: i32, %arg1: i32) -> (i32, i32) {
    %c0_i32 = arith.constant 0 : i32
    %c0_i32_0 = arith.constant 0 : i32
    return %arg0, %c0_i32 : i32, i32
  }
}

module attributes {stable_mosaic.version = 11 : i64} {
  func.func @_ffn_kernel(%arg0: i32, %arg1: i32, %arg2: memref<128x128xf32, #tpu.memory_space<vmem>>, %arg3: memref<128x128xf32, #tpu.memory_space<vmem>>, %arg4: memref<1x128xf32, #tpu.memory_space<vmem>>, %arg5: memref<128x128xf32, #tpu.memory_space<vmem>>, %arg6: memref<1x128xf32, #tpu.memory_space<vmem>>, %arg7: memref<128x128xf32, #tpu.memory_space<vmem>>, %arg8: memref<128x128xf32, #tpu.memory_space<vmem>>) attributes {dimension_semantics = [#tpu.dimension_semantics<parallel>, #tpu.dimension_semantics<arbitrary>], iteration_bounds = array<i64: 1, 1>, scalar_prefetch = 0 : i64, scratch_operands = 1 : i64, tpu.core_type = #tpu.core_type<tc>, window_params = [{transform_indices = @transform_0, window_bounds = array<i64: 128, 128>}, {transform_indices = @transform_1, window_bounds = array<i64: 128, 128>}, {transform_indices = @transform_2, window_bounds = array<i64: 1, 128>}, {transform_indices = @transform_3, window_bounds = array<i64: 128, 128>}, {pipeline_mode = #tpu.pipeline_mode<synchronous>, transform_indices = @transform_4, window_bounds = array<i64: 1, 128>}, {transform_indices = @transform_5, window_bounds = array<i64: 128, 128>}]} {
    %c0 = arith.constant 0 : index
    %c0_0 = arith.constant 0 : index
    %0 = vector.load %arg2[%c0, %c0_0] : memref<128x128xf32, #tpu.memory_space<vmem>>, vector<128x128xf32>
    %c0_1 = arith.constant 0 : index
    %c0_2 = arith.constant 0 : index
    %1 = vector.load %arg3[%c0_1, %c0_2] : memref<128x128xf32, #tpu.memory_space<vmem>>, vector<128x128xf32>
    %cst = arith.constant dense<0.000000e+00> : vector<128x128xf32>
    %2 = tpu.matmul %0, %1, %cst {dimension_numbers = #tpu.dot_dimension_numbers<[1], [0], [0], [1], [0, 0, 1, 1], [], []>} : vector<128x128xf32>, vector<128x128xf32>, vector<128x128xf32> -> vector<128x128xf32>
    %c0_3 = arith.constant 0 : index
    %c0_4 = arith.constant 0 : index
    %3 = vector.load %arg4[%c0_3, %c0_4] : memref<1x128xf32, #tpu.memory_space<vmem>>, vector<1x128xf32>
    %4 = vector.broadcast %3 : vector<1x128xf32> to vector<128x128xf32>
    %5 = arith.addf %2, %4 : vector<128x128xf32>
    %6 = arith.mulf %5, %5 : vector<128x128xf32>
    %7 = arith.mulf %5, %6 : vector<128x128xf32>
    %cst_5 = arith.constant 4.471500e-02 : f32
    %8 = vector.broadcast %cst_5 : f32 to vector<128x128xf32>
    %9 = arith.mulf %8, %7 : vector<128x128xf32>
    %10 = arith.addf %5, %9 : vector<128x128xf32>
    %cst_6 = arith.constant 0.797884583 : f32
    %11 = vector.broadcast %cst_6 : f32 to vector<128x128xf32>
    %12 = arith.mulf %11, %10 : vector<128x128xf32>
    %13 = math.tanh %12 : vector<128x128xf32>
    %cst_7 = arith.constant 1.000000e+00 : f32
    %14 = vector.broadcast %cst_7 : f32 to vector<128x128xf32>
    %15 = arith.addf %14, %13 : vector<128x128xf32>
    %cst_8 = arith.constant 5.000000e-01 : f32
    %16 = vector.broadcast %cst_8 : f32 to vector<128x128xf32>
    %17 = arith.mulf %16, %15 : vector<128x128xf32>
    %18 = arith.mulf %5, %17 : vector<128x128xf32>
    %c0_9 = arith.constant 0 : index
    %c0_10 = arith.constant 0 : index
    %19 = vector.load %arg5[%c0_9, %c0_10] : memref<128x128xf32, #tpu.memory_space<vmem>>, vector<128x128xf32>
    %cst_11 = arith.constant dense<0.000000e+00> : vector<128x128xf32>
    %20 = tpu.matmul %18, %19, %cst_11 {dimension_numbers = #tpu.dot_dimension_numbers<[1], [0], [0], [1], [0, 0, 1, 1], [], []>} : vector<128x128xf32>, vector<128x128xf32>, vector<128x128xf32> -> vector<128x128xf32>
    %c0_i32 = arith.constant 0 : i32
    %21 = arith.cmpi eq, %arg1, %c0_i32 : i32
    %22 = arith.extui %21 : i1 to i32
    %c0_i32_12 = arith.constant 0 : i32
    %23 = arith.cmpi ne, %22, %c0_i32_12 : i32
    scf.if %23 {
      %c0_17 = arith.constant 0 : index
      %c0_18 = arith.constant 0 : index
      %30 = vector.load %arg8[%c0_17, %c0_18] : memref<128x128xf32, #tpu.memory_space<vmem>>, vector<128x128xf32>
      tpu.vector_store %arg8[%c0_17, %c0_18], %20 {strides = array<i32>} : memref<128x128xf32, #tpu.memory_space<vmem>>, vector<128x128xf32>,
    } else {
    }
    %c0_i32_13 = arith.constant 0 : i32
    %24 = arith.cmpi sgt, %arg1, %c0_i32_13 : i32
    %25 = arith.extui %24 : i1 to i32
    %c0_i32_14 = arith.constant 0 : i32
    %26 = arith.cmpi ne, %25, %c0_i32_14 : i32
    scf.if %26 {
      %c0_17 = arith.constant 0 : index
      %c0_18 = arith.constant 0 : index
      %30 = vector.load %arg8[%c0_17, %c0_18] : memref<128x128xf32, #tpu.memory_space<vmem>>, vector<128x128xf32>
      %31 = arith.addf %30, %20 : vector<128x128xf32>
      %c0_19 = arith.constant 0 : index
      %c0_20 = arith.constant 0 : index
      %32 = vector.load %arg8[%c0_19, %c0_20] : memref<128x128xf32, #tpu.memory_space<vmem>>, vector<128x128xf32>
      tpu.vector_store %arg8[%c0_19, %c0_20], %31 {strides = array<i32>} : memref<128x128xf32, #tpu.memory_space<vmem>>, vector<128x128xf32>,
    } else {
    }
    %c0_i32_15 = arith.constant 0 : i32
    %27 = arith.cmpi eq, %arg1, %c0_i32_15 : i32
    %28 = arith.extui %27 : i1 to i32
    %c0_i32_16 = arith.constant 0 : i32
    %29 = arith.cmpi ne, %28, %c0_i32_16 : i32
    scf.if %29 {
      %c0_17 = arith.constant 0 : index
      %c0_18 = arith.constant 0 : index
      %30 = vector.load %arg8[%c0_17, %c0_18] : memref<128x128xf32, #tpu.memory_space<vmem>>, vector<128x128xf32>
      %c0_19 = arith.constant 0 : index
      %c0_20 = arith.constant 0 : index
      %31 = vector.load %arg6[%c0_19, %c0_20] : memref<1x128xf32, #tpu.memory_space<vmem>>, vector<1x128xf32>
      %32 = vector.broadcast %31 : vector<1x128xf32> to vector<128x128xf32>
      %33 = arith.addf %30, %32 : vector<128x128xf32>
      %c0_21 = arith.constant 0 : index
      %c0_22 = arith.constant 0 : index
      %34 = vector.load %arg7[%c0_21, %c0_22] : memref<128x128xf32, #tpu.memory_space<vmem>>, vector<128x128xf32>
      tpu.vector_store %arg7[%c0_21, %c0_22], %33 {strides = array<i32>} : memref<128x128xf32, #tpu.memory_space<vmem>>, vector<128x128xf32>,
    } else {
    }
    return
  }
  func.func @transform_0(%arg0: i32, %arg1: i32) -> (i32, i32) {
    %c0_i32 = arith.constant 0 : i32
    %c0_i32_0 = arith.constant 0 : i32
    return %arg0, %c0_i32 : i32, i32
  }
  func.func @transform_1(%arg0: i32, %arg1: i32) -> (i32, i32) {
    %c0_i32 = arith.constant 0 : i32
    %c0_i32_0 = arith.constant 0 : i32
    return %c0_i32, %arg1 : i32, i32
  }
  func.func @transform_2(%arg0: i32, %arg1: i32) -> (i32, i32) {
    %c0_i32 = arith.constant 0 : i32
    %c0_i32_0 = arith.constant 0 : i32
    return %c0_i32, %arg1 : i32, i32
  }
  func.func @transform_3(%arg0: i32, %arg1: i32) -> (i32, i32) {
    %c0_i32 = arith.constant 0 : i32
    %c0_i32_0 = arith.constant 0 : i32
    return %arg1, %c0_i32 : i32, i32
  }
  func.func @transform_4(%arg0: i32, %arg1: i32) -> (i32, i32) {
    %c0_i32 = arith.constant 0 : i32
    %c0_i32_0 = arith.constant 0 : i32
    %c0_i32_1 = arith.constant 0 : i32
    return %c0_i32, %c0_i32_0 : i32, i32
  }
  func.func @transform_5(%arg0: i32, %arg1: i32) -> (i32, i32) {
    %c0_i32 = arith.constant 0 : i32
    %c0_i32_0 = arith.constant 0 : i32
    return %arg0, %c0_i32 : i32, i32
  }
}

</mosaic_0001>

<llo_original>
// kernel: _chunked_ffn.1
$region0: #{_chunked_ffn.1}
  #allocation0 [shape = 'u32[]', space=smem, size = 0x4, offset = 0x4, fixed_abs, tag = 'smem constant byte address 0x4 - core index']
  #allocation1 [shape = 'u32[72,128]{1,0:T(1,128)}', space=vmem, size = 0x9000, scoped, tag = 'internal scratch']
  #allocation2 [shape = 'f32[128,128]{1,0:T(8,128)}', space=vmem, size = 0x10000, scoped, tag = 'scratch operand']
  %s0 = inlined_call_operand.vmem [shape: f32[128,128], index: 0, kind: input, shape index: {}]
  %s1 = inlined_call_operand.vmem [shape: f32[128,128], index: 1, kind: input, shape index: {}]
  %s2 = inlined_call_operand.vmem [shape: f32[1,128], index: 2, kind: input, shape index: {}]
  %s3 = inlined_call_operand.vmem [shape: f32[128,128], index: 3, kind: input, shape index: {}]
  %s4 = inlined_call_operand.vmem [shape: f32[1,128], index: 4, kind: input, shape index: {}]
  %s5 = inlined_call_operand.vmem [shape: f32[128,128], index: 5, kind: output, shape index: {}]
  %s6 = sld [smem:[#allocation0]]
  $region42: #{_chunked_ffn.1} parent=0
    _
  %s8 = ssub.s32 1, %s6
  %s9 = scalar_select 0, %s8, %s6
  // Predicated region
  $region2: #{_chunked_ffn.1} parent=0 // pred_check
    _
  $region3: #{_chunked_ffn.1} parent=0 // pred_check_branch
    %11 = sbr.rel (0) target = $region5
  $region4: #{_chunked_ffn.1} parent=0 // pred_region
    _
  $region5: #{_chunked_ffn.1} parent=0 // pred_fallthru
    _
  // Predicated region
  $region6: #{_chunked_ffn.1} parent=0 // pred_check
    _
  $region7: #{_chunked_ffn.1} parent=0 // pred_check_branch
    %13 = sbr.rel (0) target = $region9
  $region8: #{_chunked_ffn.1} parent=0 // pred_region
    _
  $region9: #{_chunked_ffn.1} parent=0 // pred_fallthru
    _
  // Predicated region
  $region10: #{_chunked_ffn.1} parent=0 // pred_check
    _
  $region11: #{_chunked_ffn.1} parent=0 // pred_check_branch
    %15 = sbr.rel (0) target = $region13
  $region12: #{_chunked_ffn.1} parent=0 // pred_region
    _
  $region13: #{_chunked_ffn.1} parent=0 // pred_fallthru
    _
  // Predicated region
  $region14: #{_chunked_ffn.1} parent=0 // pred_check
    _
  $region15: #{_chunked_ffn.1} parent=0 // pred_check_branch
    %17 = sbr.rel (0) target = $region17
  $region16: #{_chunked_ffn.1} parent=0 // pred_region
    _
  $region17: #{_chunked_ffn.1} parent=0 // pred_fallthru
    _
  // Predicated region
  $region18: #{_chunked_ffn.1} parent=0 // pred_check
    _
  $region19: #{_chunked_ffn.1} parent=0 // pred_check_branch
    %19 = sbr.rel (0) target = $region21
  $region20: #{_chunked_ffn.1} parent=0 // pred_region
    _
  $region21: #{_chunked_ffn.1} parent=0 // pred_fallthru
    _
  %v20 = vld [vmem:[%s0] sm:$0xff]
  %v21 = vld [vmem:[%s0 + $0x8] sm:$0xff]
  %v22 = vld [vmem:[%s0 + $0x10] sm:$0xff]
  %v23 = vld [vmem:[%s0 + $0x18] sm:$0xff]
  %v24 = vld [vmem:[%s0 + $0x20] sm:$0xff]
  %v25 = vld [vmem:[%s0 + $0x28] sm:$0xff]
  %v26 = vld [vmem:[%s0 + $0x30] sm:$0xff]
  %v27 = vld [vmem:[%s0 + $0x38] sm:$0xff]
  %v28 = vld [vmem:[%s0 + $0x40] sm:$0xff]
  %v29 = vld [vmem:[%s0 + $0x48] sm:$0xff]
  %v30 = vld [vmem:[%s0 + $0x50] sm:$0xff]
  %v31 = vld [vmem:[%s0 + $0x58] sm:$0xff]
  %v32 = vld [vmem:[%s0 + $0x60] sm:$0xff]
  %v33 = vld [vmem:[%s0 + $0x68] sm:$0xff]
  %v34 = vld [vmem:[%s0 + $0x70] sm:$0xff]
  %v35 = vld [vmem:[%s0 + $0x78] sm:$0xff]
  %v36 = vld [vmem:[%s1] sm:$0xff]
  %v37 = vld [vmem:[%s1 + $0x8] sm:$0xff]
  %v38 = vld [vmem:[%s1 + $0x10] sm:$0xff]
  %v39 = vld [vmem:[%s1 + $0x18] sm:$0xff]
  %v40 = vld [vmem:[%s1 + $0x20] sm:$0xff]
  %v41 = vld [vmem:[%s1 + $0x28] sm:$0xff]
  %v42 = vld [vmem:[%s1 + $0x30] sm:$0xff]
  %v43 = vld [vmem:[%s1 + $0x38] sm:$0xff]
  %v44 = vld [vmem:[%s1 + $0x40] sm:$0xff]
  %v45 = vld [vmem:[%s1 + $0x48] sm:$0xff]
  %v46 = vld [vmem:[%s1 + $0x50] sm:$0xff]
  %v47 = vld [vmem:[%s1 + $0x58] sm:$0xff]
  %v48 = vld [vmem:[%s1 + $0x60] sm:$0xff]
  %v49 = vld [vmem:[%s1 + $0x68] sm:$0xff]
  %v50 = vld [vmem:[%s1 + $0x70] sm:$0xff]
  %v51 = vld [vmem:[%s1 + $0x78] sm:$0xff]
  %v52 = vld [vmem:[%s2] sm:$0x1]
  %v54 = vperm.slane %v52, 0
  %56 = vmatpush.msra.mxu0 %v51
  %57 = vmatpush.msra.mxu0 %v50
  %58 = vmatpush.msra.mxu0 %v49
  %59 = vmatpush.msra.mxu0 %v48
  %60 = vmatpush.msra.mxu0 %v47
  %61 = vmatpush.msra.mxu0 %v46
  %62 = vmatpush.msra.mxu0 %v45
  %63 = vmatpush.msra.mxu0 %v44
  %64 = vmatpush.msra.mxu0 %v43
  %65 = vmatpush.msra.mxu0 %v42
  %66 = vmatpush.msra.mxu0 %v41
  %67 = vmatpush.msra.mxu0 %v40
  %68 = vmatpush.msra.mxu0 %v39
  %69 = vmatpush.msra.mxu0 %v38
  %70 = vmatpush.msra.mxu0 %v37
  %71 = vmatpush.msra.mxu0 %v36
  %72 = vmatmul.f32.gmra.mxu0 %v20
  %v73 = vpop.f32.mrf.mxu0
  %v74 = vadd.f32 %v54, %v73
  %75 = vmatmul.f32.gmra.mxu0 %v21
  %v76 = vpop.f32.mrf.mxu0
  %v77 = vadd.f32 %v54, %v76
  %78 = vmatmul.f32.gmra.mxu0 %v22
  %v79 = vpop.f32.mrf.mxu0
  %v80 = vadd.f32 %v54, %v79
  %81 = vmatmul.f32.gmra.mxu0 %v23
  %v82 = vpop.f32.mrf.mxu0
  %v83 = vadd.f32 %v54, %v82
  %84 = vmatmul.f32.gmra.mxu0 %v24
  %v85 = vpop.f32.mrf.mxu0
  %v86 = vadd.f32 %v54, %v85
  %87 = vmatmul.f32.gmra.mxu0 %v25
  %v88 = vpop.f32.mrf.mxu0
  %v89 = vadd.f32 %v54, %v88
  %90 = vmatmul.f32.gmra.mxu0 %v26
  %v91 = vpop.f32.mrf.mxu0
  %v92 = vadd.f32 %v54, %v91
  %93 = vmatmul.f32.gmra.mxu0 %v27
  %v94 = vpop.f32.mrf.mxu0
  %v95 = vadd.f32 %v54, %v94
  %96 = vmatmul.f32.gmra.mxu0 %v28
  %v97 = vpop.f32.mrf.mxu0
  %v98 = vadd.f32 %v54, %v97
  %99 = vmatmul.f32.gmra.mxu0 %v29
  %v100 = vpop.f32.mrf.mxu0
  %v101 = vadd.f32 %v54, %v100
  %102 = vmatmul.f32.gmra.mxu0 %v30
  %v103 = vpop.f32.mrf.mxu0
  %v104 = vadd.f32 %v54, %v103
  %105 = vmatmul.f32.gmra.mxu0 %v31
  %v106 = vpop.f32.mrf.mxu0
  %v107 = vadd.f32 %v54, %v106
  %108 = vmatmul.f32.gmra.mxu0 %v32
  %v109 = vpop.f32.mrf.mxu0
  %v110 = vadd.f32 %v54, %v109
  %111 = vmatmul.f32.gmra.mxu0 %v33
  %v112 = vpop.f32.mrf.mxu0
  %v113 = vadd.f32 %v54, %v112
  %114 = vmatmul.f32.gmra.mxu0 %v34
  %v115 = vpop.f32.mrf.mxu0
  %v116 = vadd.f32 %v54, %v115
  %117 = vmatmul.f32.gmra.mxu0 %v35
  %v118 = vpop.f32.mrf.mxu0
  %v119 = vadd.f32 %v54, %v118
  %120 = vdwg.mxu0
  %v121 = vmul.f32 %v74, %v74
  %v122 = vmul.f32 %v77, %v77
  %v123 = vmul.f32 %v80, %v80
  %v124 = vmul.f32 %v83, %v83
  %v125 = vmul.f32 %v86, %v86
  %v126 = vmul.f32 %v89, %v89
  %v127 = vmul.f32 %v92, %v92
  %v128 = vmul.f32 %v95, %v95
  %v129 = vmul.f32 %v98, %v98
  %v130 = vmul.f32 %v101, %v101
  %v131 = vmul.f32 %v104, %v104
  %v132 = vmul.f32 %v107, %v107
  %v133 = vmul.f32 %v110, %v110
  %v134 = vmul.f32 %v113, %v113
  %v135 = vmul.f32 %v116, %v116
  %v136 = vmul.f32 %v119, %v119
  %v137 = vmul.f32 %v74, %v121
  %v138 = vmul.f32 %v77, %v122
  %v139 = vmul.f32 %v80, %v123
  %v140 = vmul.f32 %v83, %v124
  %v141 = vmul.f32 %v86, %v125
  %v142 = vmul.f32 %v89, %v126
  %v143 = vmul.f32 %v92, %v127
  %v144 = vmul.f32 %v95, %v128
  %v145 = vmul.f32 %v98, %v129
  %v146 = vmul.f32 %v101, %v130
  %v147 = vmul.f32 %v104, %v131
  %v148 = vmul.f32 %v107, %v132
  %v149 = vmul.f32 %v110, %v133
  %v150 = vmul.f32 %v113, %v134
  %v151 = vmul.f32 %v116, %v135
  %v152 = vmul.f32 %v119, %v136
  %v153 = vmul.f32 %v137, 0.044715
  %v154 = vmul.f32 %v138, 0.044715
  %v155 = vmul.f32 %v139, 0.044715
  %v156 = vmul.f32 %v140, 0.044715
  %v157 = vmul.f32 %v141, 0.044715
  %v158 = vmul.f32 %v142, 0.044715
  %v159 = vmul.f32 %v143, 0.044715
  %v160 = vmul.f32 %v144, 0.044715
  %v161 = vmul.f32 %v145, 0.044715
  %v162 = vmul.f32 %v146, 0.044715
  %v163 = vmul.f32 %v147, 0.044715
  %v164 = vmul.f32 %v148, 0.044715
  %v165 = vmul.f32 %v149, 0.044715
  %v166 = vmul.f32 %v150, 0.044715
  %v167 = vmul.f32 %v151, 0.044715
  %v168 = vmul.f32 %v152, 0.044715
  %v169 = vadd.f32 %v74, %v153
  %v170 = vadd.f32 %v77, %v154
  %v171 = vadd.f32 %v80, %v155
  %v172 = vadd.f32 %v83, %v156
  %v173 = vadd.f32 %v86, %v157
  %v174 = vadd.f32 %v89, %v158
  %v175 = vadd.f32 %v92, %v159
  %v176 = vadd.f32 %v95, %v160
  %v177 = vadd.f32 %v98, %v161
  %v178 = vadd.f32 %v101, %v162
  %v179 = vadd.f32 %v104, %v163
  %v180 = vadd.f32 %v107, %v164
  %v181 = vadd.f32 %v110, %v165
  %v182 = vadd.f32 %v113, %v166
  %v183 = vadd.f32 %v116, %v167
  %v184 = vadd.f32 %v119, %v168
  %v185 = vmul.f32 %v169, 0.7978846
  %v186 = vmul.f32 %v170, 0.7978846
  %v187 = vmul.f32 %v171, 0.7978846
  %v188 = vmul.f32 %v172, 0.7978846
  %v189 = vmul.f32 %v173, 0.7978846
  %v190 = vmul.f32 %v174, 0.7978846
  %v191 = vmul.f32 %v175, 0.7978846
  %v192 = vmul.f32 %v176, 0.7978846
  %v193 = vmul.f32 %v177, 0.7978846
  %v194 = vmul.f32 %v178, 0.7978846
  %v195 = vmul.f32 %v179, 0.7978846
  %v196 = vmul.f32 %v180, 0.7978846
  %v197 = vmul.f32 %v181, 0.7978846
  %v198 = vmul.f32 %v182, 0.7978846
  %v199 = vmul.f32 %v183, 0.7978846
  %v200 = vmul.f32 %v184, 0.7978846
  %v201 = vtanh.pop %v185
  %v202 = vtanh.pop %v186
  %v203 = vtanh.pop %v187
  %v204 = vtanh.pop %v188
  %v205 = vtanh.pop %v189
  %v206 = vtanh.pop %v190
  %v207 = vtanh.pop %v191
  %v208 = vtanh.pop %v192
  %v209 = vtanh.pop %v193
  %v210 = vtanh.pop %v194
  %v211 = vtanh.pop %v195
  %v212 = vtanh.pop %v196
  %v213 = vtanh.pop %v197
  %v214 = vtanh.pop %v198
  %v215 = vtanh.pop %v199
  %v216 = vtanh.pop %v200
  %v217 = vadd.f32 %v201, 1.0
  %v218 = vadd.f32 %v202, 1.0
  %v219 = vadd.f32 %v203, 1.0
  %v220 = vadd.f32 %v204, 1.0
  %v221 = vadd.f32 %v205, 1.0
  %v222 = vadd.f32 %v206, 1.0
  %v223 = vadd.f32 %v207, 1.0
  %v224 = vadd.f32 %v208, 1.0
  %v225 = vadd.f32 %v209, 1.0
  %v226 = vadd.f32 %v210, 1.0
  %v227 = vadd.f32 %v211, 1.0
  %v228 = vadd.f32 %v212, 1.0
  %v229 = vadd.f32 %v213, 1.0
  %v230 = vadd.f32 %v214, 1.0
  %v231 = vadd.f32 %v215, 1.0
  %v232 = vadd.f32 %v216, 1.0
  %v233 = vmul.f32 %v217, 0.5
  %v234 = vmul.f32 %v218, 0.5
  %v235 = vmul.f32 %v219, 0.5
  %v236 = vmul.f32 %v220, 0.5
  %v237 = vmul.f32 %v221, 0.5
  %v238 = vmul.f32 %v222, 0.5
  %v239 = vmul.f32 %v223, 0.5
  %v240 = vmul.f32 %v224, 0.5
  %v241 = vmul.f32 %v225, 0.5
  %v242 = vmul.f32 %v226, 0.5
  %v243 = vmul.f32 %v227, 0.5
  %v244 = vmul.f32 %v228, 0.5
  %v245 = vmul.f32 %v229, 0.5
  %v246 = vmul.f32 %v230, 0.5
  %v247 = vmul.f32 %v231, 0.5
  %v248 = vmul.f32 %v232, 0.5
  %v249 = vmul.f32 %v74, %v233
  %v250 = vmul.f32 %v77, %v234
  %v251 = vmul.f32 %v80, %v235
  %v252 = vmul.f32 %v83, %v236
  %v253 = vmul.f32 %v86, %v237
  %v254 = vmul.f32 %v89, %v238
  %v255 = vmul.f32 %v92, %v239
  %v256 = vmul.f32 %v95, %v240
  %v257 = vmul.f32 %v98, %v241
  %v258 = vmul.f32 %v101, %v242
  %v259 = vmul.f32 %v104, %v243
  %v260 = vmul.f32 %v107, %v244
  %v261 = vmul.f32 %v110, %v245
  %v262 = vmul.f32 %v113, %v246
  %v263 = vmul.f32 %v116, %v247
  %v264 = vmul.f32 %v119, %v248
  %v265 = vld [vmem:[%s3] sm:$0xff]
  %v266 = vld [vmem:[%s3 + $0x8] sm:$0xff]
  %v267 = vld [vmem:[%s3 + $0x10] sm:$0xff]
  %v268 = vld [vmem:[%s3 + $0x18] sm:$0xff]
  %v269 = vld [vmem:[%s3 + $0x20] sm:$0xff]
  %v270 = vld [vmem:[%s3 + $0x28] sm:$0xff]
  %v271 = vld [vmem:[%s3 + $0x30] sm:$0xff]
  %v272 = vld [vmem:[%s3 + $0x38] sm:$0xff]
  %v273 = vld [vmem:[%s3 + $0x40] sm:$0xff]
  %v274 = vld [vmem:[%s3 + $0x48] sm:$0xff]
  %v275 = vld [vmem:[%s3 + $0x50] sm:$0xff]
  %v276 = vld [vmem:[%s3 + $0x58] sm:$0xff]
  %v277 = vld [vmem:[%s3 + $0x60] sm:$0xff]
  %v278 = vld [vmem:[%s3 + $0x68] sm:$0xff]
  %v279 = vld [vmem:[%s3 + $0x70] sm:$0xff]
  %v280 = vld [vmem:[%s3 + $0x78] sm:$0xff]
  %281 = vmatpush.msra.mxu0 %v280
  %282 = vmatpush.msra.mxu0 %v279
  %283 = vmatpush.msra.mxu0 %v278
  %284 = vmatpush.msra.mxu0 %v277
  %285 = vmatpush.msra.mxu0 %v276
  %286 = vmatpush.msra.mxu0 %v275
  %287 = vmatpush.msra.mxu0 %v274
  %288 = vmatpush.msra.mxu0 %v273
  %289 = vmatpush.msra.mxu0 %v272
  %290 = vmatpush.msra.mxu0 %v271
  %291 = vmatpush.msra.mxu0 %v270
  %292 = vmatpush.msra.mxu0 %v269
  %293 = vmatpush.msra.mxu0 %v268
  %294 = vmatpush.msra.mxu0 %v267
  %295 = vmatpush.msra.mxu0 %v266
  %296 = vmatpush.msra.mxu0 %v265
  %297 = vmatmul.f32.gmra.mxu0 %v249
  %v298 = vpop.f32.mrf.mxu0
  %v299 = vadd.f32 0.0, %v298
  %300 = vmatmul.f32.gmra.mxu0 %v250
  %v301 = vpop.f32.mrf.mxu0
  %v302 = vadd.f32 0.0, %v301
  %303 = vmatmul.f32.gmra.mxu0 %v251
  %v304 = vpop.f32.mrf.mxu0
  %v305 = vadd.f32 0.0, %v304
  %306 = vmatmul.f32.gmra.mxu0 %v252
  %v307 = vpop.f32.mrf.mxu0
  %v308 = vadd.f32 0.0, %v307
  %309 = vmatmul.f32.gmra.mxu0 %v253
  %v310 = vpop.f32.mrf.mxu0
  %v311 = vadd.f32 0.0, %v310
  %312 = vmatmul.f32.gmra.mxu0 %v254
  %v313 = vpop.f32.mrf.mxu0
  %v314 = vadd.f32 0.0, %v313
  %315 = vmatmul.f32.gmra.mxu0 %v255
  %v316 = vpop.f32.mrf.mxu0
  %v317 = vadd.f32 0.0, %v316
  %318 = vmatmul.f32.gmra.mxu0 %v256
  %v319 = vpop.f32.mrf.mxu0
  %v320 = vadd.f32 0.0, %v319
  %321 = vmatmul.f32.gmra.mxu0 %v257
  %v322 = vpop.f32.mrf.mxu0
  %v323 = vadd.f32 0.0, %v322
  %324 = vmatmul.f32.gmra.mxu0 %v258
  %v325 = vpop.f32.mrf.mxu0
  %v326 = vadd.f32 0.0, %v325
  %327 = vmatmul.f32.gmra.mxu0 %v259
  %v328 = vpop.f32.mrf.mxu0
  %v329 = vadd.f32 0.0, %v328
  %330 = vmatmul.f32.gmra.mxu0 %v260
  %v331 = vpop.f32.mrf.mxu0
  %v332 = vadd.f32 0.0, %v331
  %333 = vmatmul.f32.gmra.mxu0 %v261
  %v334 = vpop.f32.mrf.mxu0
  %v335 = vadd.f32 0.0, %v334
  %336 = vmatmul.f32.gmra.mxu0 %v262
  %v337 = vpop.f32.mrf.mxu0
  %v338 = vadd.f32 0.0, %v337
  %339 = vmatmul.f32.gmra.mxu0 %v263
  %v340 = vpop.f32.mrf.mxu0
  %v341 = vadd.f32 0.0, %v340
  %342 = vmatmul.f32.gmra.mxu0 %v264
  %v343 = vpop.f32.mrf.mxu0
  %v344 = vadd.f32 0.0, %v343
  %345 = vdwg.mxu0
  %p346 = scmp.eq.s32.totalorder 0, 0
  // Predicated region
  $region22: #{_chunked_ffn.1} parent=0 // pred_check
    %p347 = pneg %p346
  $region23: #{_chunked_ffn.1} parent=0 // pred_check_branch
    %349 = sbr.rel (%p347) target = $region25
  $region24: #{_chunked_ffn.1} parent=0 // pred_region
    %350 = vst [vmem:[#allocation2] sm:$0xff] %v299
    %351 = vst [vmem:[#allocation2 + $0x8] sm:$0xff] %v302
    %352 = vst [vmem:[#allocation2 + $0x10] sm:$0xff] %v305
    %353 = vst [vmem:[#allocation2 + $0x18] sm:$0xff] %v308
    %354 = vst [vmem:[#allocation2 + $0x20] sm:$0xff] %v311
    %355 = vst [vmem:[#allocation2 + $0x28] sm:$0xff] %v314
    %356 = vst [vmem:[#allocation2 + $0x30] sm:$0xff] %v317
    %357 = vst [vmem:[#allocation2 + $0x38] sm:$0xff] %v320
    %358 = vst [vmem:[#allocation2 + $0x40] sm:$0xff] %v323
    %359 = vst [vmem:[#allocation2 + $0x48] sm:$0xff] %v326
    %360 = vst [vmem:[#allocation2 + $0x50] sm:$0xff] %v329
    %361 = vst [vmem:[#allocation2 + $0x58] sm:$0xff] %v332
    %362 = vst [vmem:[#allocation2 + $0x60] sm:$0xff] %v335
    %363 = vst [vmem:[#allocation2 + $0x68] sm:$0xff] %v338
    %364 = vst [vmem:[#allocation2 + $0x70] sm:$0xff] %v341
    %365 = vst [vmem:[#allocation2 + $0x78] sm:$0xff] %v344
  $region25: #{_chunked_ffn.1} parent=0 // pred_fallthru
    _
  %p366 = scmp.gt.s32.totalorder 0, 0
  // Predicated region
  $region26: #{_chunked_ffn.1} parent=0 // pred_check
    %p367 = pneg %p366
  $region27: #{_chunked_ffn.1} parent=0 // pred_check_branch
    %369 = sbr.rel (%p367) target = $region29
  $region28: #{_chunked_ffn.1} parent=0 // pred_region
    %v370 = vld [vmem:[#allocation2] sm:$0xff]
    %v371 = vld [vmem:[#allocation2 + $0x8] sm:$0xff]
    %v372 = vld [vmem:[#allocation2 + $0x10] sm:$0xff]
    %v373 = vld [vmem:[#allocation2 + $0x18] sm:$0xff]
    %v374 = vld [vmem:[#allocation2 + $0x20] sm:$0xff]
    %v375 = vld [vmem:[#allocation2 + $0x28] sm:$0xff]
    %v376 = vld [vmem:[#allocation2 + $0x30] sm:$0xff]
    %v377 = vld [vmem:[#allocation2 + $0x38] sm:$0xff]
    %v378 = vld [vmem:[#allocation2 + $0x40] sm:$0xff]
    %v379 = vld [vmem:[#allocation2 + $0x48] sm:$0xff]
    %v380 = vld [vmem:[#allocation2 + $0x50] sm:$0xff]
    %v381 = vld [vmem:[#allocation2 + $0x58] sm:$0xff]
    %v382 = vld [vmem:[#allocation2 + $0x60] sm:$0xff]
    %v383 = vld [vmem:[#allocation2 + $0x68] sm:$0xff]
    %v384 = vld [vmem:[#allocation2 + $0x70] sm:$0xff]
    %v385 = vld [vmem:[#allocation2 + $0x78] sm:$0xff]
    %v386 = vadd.f32 %v370, %v299
    %v387 = vadd.f32 %v371, %v302
    %v388 = vadd.f32 %v372, %v305
    %v389 = vadd.f32 %v373, %v308
    %v390 = vadd.f32 %v374, %v311
    %v391 = vadd.f32 %v375, %v314
    %v392 = vadd.f32 %v376, %v317
    %v393 = vadd.f32 %v377, %v320
    %v394 = vadd.f32 %v378, %v323
    %v395 = vadd.f32 %v379, %v326
    %v396 = vadd.f32 %v380, %v329
    %v397 = vadd.f32 %v381, %v332
    %v398 = vadd.f32 %v382, %v335
    %v399 = vadd.f32 %v383, %v338
    %v400 = vadd.f32 %v384, %v341
    %v401 = vadd.f32 %v385, %v344
    %402 = vst [vmem:[#allocation2] sm:$0xff] %v386
    %403 = vst [vmem:[#allocation2 + $0x8] sm:$0xff] %v387
    %404 = vst [vmem:[#allocation2 + $0x10] sm:$0xff] %v388
    %405 = vst [vmem:[#allocation2 + $0x18] sm:$0xff] %v389
    %406 = vst [vmem:[#allocation2 + $0x20] sm:$0xff] %v390
    %407 = vst [vmem:[#allocation2 + $0x28] sm:$0xff] %v391
    %408 = vst [vmem:[#allocation2 + $0x30] sm:$0xff] %v392
    %409 = vst [vmem:[#allocation2 + $0x38] sm:$0xff] %v393
    %410 = vst [vmem:[#allocation2 + $0x40] sm:$0xff] %v394
    %411 = vst [vmem:[#allocation2 + $0x48] sm:$0xff] %v395
    %412 = vst [vmem:[#allocation2 + $0x50] sm:$0xff] %v396
    %413 = vst [vmem:[#allocation2 + $0x58] sm:$0xff] %v397
    %414 = vst [vmem:[#allocation2 + $0x60] sm:$0xff] %v398
    %415 = vst [vmem:[#allocation2 + $0x68] sm:$0xff] %v399
    %416 = vst [vmem:[#allocation2 + $0x70] sm:$0xff] %v400
    %417 = vst [vmem:[#allocation2 + $0x78] sm:$0xff] %v401
  $region29: #{_chunked_ffn.1} parent=0 // pred_fallthru
    _
  // Predicated region
  $region30: #{_chunked_ffn.1} parent=0 // pred_check
    %p418 = pneg %p346
  $region31: #{_chunked_ffn.1} parent=0 // pred_check_branch
    %420 = sbr.rel (%p418) target = $region33
  $region32: #{_chunked_ffn.1} parent=0 // pred_region
    %v421 = vld [vmem:[#allocation2] sm:$0xff]
    %v422 = vld [vmem:[#allocation2 + $0x8] sm:$0xff]
    %v423 = vld [vmem:[#allocation2 + $0x10] sm:$0xff]
    %v424 = vld [vmem:[#allocation2 + $0x18] sm:$0xff]
    %v425 = vld [vmem:[#allocation2 + $0x20] sm:$0xff]
    %v426 = vld [vmem:[#allocation2 + $0x28] sm:$0xff]
    %v427 = vld [vmem:[#allocation2 + $0x30] sm:$0xff]
    %v428 = vld [vmem:[#allocation2 + $0x38] sm:$0xff]
    %v429 = vld [vmem:[#allocation2 + $0x40] sm:$0xff]
    %v430 = vld [vmem:[#allocation2 + $0x48] sm:$0xff]
    %v431 = vld [vmem:[#allocation2 + $0x50] sm:$0xff]
    %v432 = vld [vmem:[#allocation2 + $0x58] sm:$0xff]
    %v433 = vld [vmem:[#allocation2 + $0x60] sm:$0xff]
    %v434 = vld [vmem:[#allocation2 + $0x68] sm:$0xff]
    %v435 = vld [vmem:[#allocation2 + $0x70] sm:$0xff]
    %v436 = vld [vmem:[#allocation2 + $0x78] sm:$0xff]
    %v437 = vld [vmem:[%s4] sm:$0x1]
    %v439 = vperm.slane %v437, 0
    %v441 = vadd.f32 %v421, %v439
    %v442 = vadd.f32 %v422, %v439
    %v443 = vadd.f32 %v423, %v439
    %v444 = vadd.f32 %v424, %v439
    %v445 = vadd.f32 %v425, %v439
    %v446 = vadd.f32 %v426, %v439
    %v447 = vadd.f32 %v427, %v439
    %v448 = vadd.f32 %v428, %v439
    %v449 = vadd.f32 %v429, %v439
    %v450 = vadd.f32 %v430, %v439
    %v451 = vadd.f32 %v431, %v439
    %v452 = vadd.f32 %v432, %v439
    %v453 = vadd.f32 %v433, %v439
    %v454 = vadd.f32 %v434, %v439
    %v455 = vadd.f32 %v435, %v439
    %v456 = vadd.f32 %v436, %v439
    %457 = vst [vmem:[%s5] sm:$0xff] %v441
    %458 = vst [vmem:[%s5 + $0x8] sm:$0xff] %v442
    %459 = vst [vmem:[%s5 + $0x10] sm:$0xff] %v443
    %460 = vst [vmem:[%s5 + $0x18] sm:$0xff] %v444
    %461 = vst [vmem:[%s5 + $0x20] sm:$0xff] %v445
    %462 = vst [vmem:[%s5 + $0x28] sm:$0xff] %v446
    %463 = vst [vmem:[%s5 + $0x30] sm:$0xff] %v447
    %464 = vst [vmem:[%s5 + $0x38] sm:$0xff] %v448
    %465 = vst [vmem:[%s5 + $0x40] sm:$0xff] %v449
    %466 = vst [vmem:[%s5 + $0x48] sm:$0xff] %v450
    %467 = vst [vmem:[%s5 + $0x50] sm:$0xff] %v451
    %468 = vst [vmem:[%s5 + $0x58] sm:$0xff] %v452
    %469 = vst [vmem:[%s5 + $0x60] sm:$0xff] %v453
    %470 = vst [vmem:[%s5 + $0x68] sm:$0xff] %v454
    %471 = vst [vmem:[%s5 + $0x70] sm:$0xff] %v455
    %472 = vst [vmem:[%s5 + $0x78] sm:$0xff] %v456
  $region33: #{_chunked_ffn.1} parent=0 // pred_fallthru
    _
  // Predicated region
  $region34: #{_chunked_ffn.1} parent=0 // pred_check
    _
  $region35: #{_chunked_ffn.1} parent=0 // pred_check_branch
    %474 = sbr.rel (0) target = $region37
  $region36: #{_chunked_ffn.1} parent=0 // pred_region
    _
  $region37: #{_chunked_ffn.1} parent=0 // pred_fallthru
    _
  // Predicated region
  $region38: #{_chunked_ffn.1} parent=0 // pred_check
    _
  $region39: #{_chunked_ffn.1} parent=0 // pred_check_branch
    %476 = sbr.rel (0) target = $region41
  $region40: #{_chunked_ffn.1} parent=0 // pred_region
    _
  $region41: #{_chunked_ffn.1} parent=0 // pred_fallthru
    _

// kernel: _chunked_ffn.1
$region0: #{_chunked_ffn.1}
  #allocation0 [shape = 'u32[]', space=smem, size = 0x4, offset = 0x4, fixed_abs, tag = 'smem constant byte address 0x4 - core index']
  #allocation1 [shape = 'u32[72,128]{1,0:T(1,128)}', space=vmem, size = 0x9000, scoped, tag = 'internal scratch']
  #allocation2 [shape = 'f32[128,128]{1,0:T(8,128)}', space=vmem, size = 0x10000, scoped, tag = 'scratch operand']
  %s0 = inlined_call_operand.vmem [shape: f32[128,128], index: 0, kind: input, shape index: {}]
  %s1 = inlined_call_operand.vmem [shape: f32[128,128], index: 1, kind: input, shape index: {}]
  %s2 = inlined_call_operand.vmem [shape: f32[1,128], index: 2, kind: input, shape index: {}]
  %s3 = inlined_call_operand.vmem [shape: f32[128,128], index: 3, kind: input, shape index: {}]
  %s4 = inlined_call_operand.vmem [shape: f32[1,128], index: 4, kind: input, shape index: {}]
  %s5 = inlined_call_operand.vmem [shape: f32[128,128], index: 5, kind: output, shape index: {}]
  %s6 = sld [smem:[#allocation0]]
  $region42: #{_chunked_ffn.1} parent=0
    _
  %s8 = ssub.s32 1, %s6
  %s9 = scalar_select 0, %s8, %s6
  // Predicated region
  $region2: #{_chunked_ffn.1} parent=0 // pred_check
    _
  $region3: #{_chunked_ffn.1} parent=0 // pred_check_branch
    %11 = sbr.rel (0) target = $region5
  $region4: #{_chunked_ffn.1} parent=0 // pred_region
    _
  $region5: #{_chunked_ffn.1} parent=0 // pred_fallthru
    _
  // Predicated region
  $region6: #{_chunked_ffn.1} parent=0 // pred_check
    _
  $region7: #{_chunked_ffn.1} parent=0 // pred_check_branch
    %13 = sbr.rel (0) target = $region9
  $region8: #{_chunked_ffn.1} parent=0 // pred_region
    _
  $region9: #{_chunked_ffn.1} parent=0 // pred_fallthru
    _
  // Predicated region
  $region10: #{_chunked_ffn.1} parent=0 // pred_check
    _
  $region11: #{_chunked_ffn.1} parent=0 // pred_check_branch
    %15 = sbr.rel (0) target = $region13
  $region12: #{_chunked_ffn.1} parent=0 // pred_region
    _
  $region13: #{_chunked_ffn.1} parent=0 // pred_fallthru
    _
  // Predicated region
  $region14: #{_chunked_ffn.1} parent=0 // pred_check
    _
  $region15: #{_chunked_ffn.1} parent=0 // pred_check_branch
    %17 = sbr.rel (0) target = $region17
  $region16: #{_chunked_ffn.1} parent=0 // pred_region
    _
  $region17: #{_chunked_ffn.1} parent=0 // pred_fallthru
    _
  // Predicated region
  $region18: #{_chunked_ffn.1} parent=0 // pred_check
    _
  $region19: #{_chunked_ffn.1} parent=0 // pred_check_branch
    %19 = sbr.rel (0) target = $region21
  $region20: #{_chunked_ffn.1} parent=0 // pred_region
    _
  $region21: #{_chunked_ffn.1} parent=0 // pred_fallthru
    _
  %v20 = vld [vmem:[%s0] sm:$0xff]
  %v21 = vld [vmem:[%s0 + $0x8] sm:$0xff]
  %v22 = vld [vmem:[%s0 + $0x10] sm:$0xff]
  %v23 = vld [vmem:[%s0 + $0x18] sm:$0xff]
  %v24 = vld [vmem:[%s0 + $0x20] sm:$0xff]
  %v25 = vld [vmem:[%s0 + $0x28] sm:$0xff]
  %v26 = vld [vmem:[%s0 + $0x30] sm:$0xff]
  %v27 = vld [vmem:[%s0 + $0x38] sm:$0xff]
  %v28 = vld [vmem:[%s0 + $0x40] sm:$0xff]
  %v29 = vld [vmem:[%s0 + $0x48] sm:$0xff]
  %v30 = vld [vmem:[%s0 + $0x50] sm:$0xff]
  %v31 = vld [vmem:[%s0 + $0x58] sm:$0xff]
  %v32 = vld [vmem:[%s0 + $0x60] sm:$0xff]
  %v33 = vld [vmem:[%s0 + $0x68] sm:$0xff]
  %v34 = vld [vmem:[%s0 + $0x70] sm:$0xff]
  %v35 = vld [vmem:[%s0 + $0x78] sm:$0xff]
  %v36 = vld [vmem:[%s1] sm:$0xff]
  %v37 = vld [vmem:[%s1 + $0x8] sm:$0xff]
  %v38 = vld [vmem:[%s1 + $0x10] sm:$0xff]
  %v39 = vld [vmem:[%s1 + $0x18] sm:$0xff]
  %v40 = vld [vmem:[%s1 + $0x20] sm:$0xff]
  %v41 = vld [vmem:[%s1 + $0x28] sm:$0xff]
  %v42 = vld [vmem:[%s1 + $0x30] sm:$0xff]
  %v43 = vld [vmem:[%s1 + $0x38] sm:$0xff]
  %v44 = vld [vmem:[%s1 + $0x40] sm:$0xff]
  %v45 = vld [vmem:[%s1 + $0x48] sm:$0xff]
  %v46 = vld [vmem:[%s1 + $0x50] sm:$0xff]
  %v47 = vld [vmem:[%s1 + $0x58] sm:$0xff]
  %v48 = vld [vmem:[%s1 + $0x60] sm:$0xff]
  %v49 = vld [vmem:[%s1 + $0x68] sm:$0xff]
  %v50 = vld [vmem:[%s1 + $0x70] sm:$0xff]
  %v51 = vld [vmem:[%s1 + $0x78] sm:$0xff]
  %v52 = vld [vmem:[%s2] sm:$0x1]
  %v54 = vperm.slane %v52, 0
  %56 = vmatpush.msra.mxu0 %v51
  %57 = vmatpush.msra.mxu0 %v50
  %58 = vmatpush.msra.mxu0 %v49
  %59 = vmatpush.msra.mxu0 %v48
  %60 = vmatpush.msra.mxu0 %v47
  %61 = vmatpush.msra.mxu0 %v46
  %62 = vmatpush.msra.mxu0 %v45
  %63 = vmatpush.msra.mxu0 %v44
  %64 = vmatpush.msra.mxu0 %v43
  %65 = vmatpush.msra.mxu0 %v42
  %66 = vmatpush.msra.mxu0 %v41
  %67 = vmatpush.msra.mxu0 %v40
  %68 = vmatpush.msra.mxu0 %v39
  %69 = vmatpush.msra.mxu0 %v38
  %70 = vmatpush.msra.mxu0 %v37
  %71 = vmatpush.msra.mxu0 %v36
  %72 = vmatmul.f32.gmra.mxu0 %v20
  %v73 = vpop.f32.mrf.mxu0
  %v74 = vadd.f32 %v54, %v73
  %75 = vmatmul.f32.gmra.mxu0 %v21
  %v76 = vpop.f32.mrf.mxu0
  %v77 = vadd.f32 %v54, %v76
  %78 = vmatmul.f32.gmra.mxu0 %v22
  %v79 = vpop.f32.mrf.mxu0
  %v80 = vadd.f32 %v54, %v79
  %81 = vmatmul.f32.gmra.mxu0 %v23
  %v82 = vpop.f32.mrf.mxu0
  %v83 = vadd.f32 %v54, %v82
  %84 = vmatmul.f32.gmra.mxu0 %v24
  %v85 = vpop.f32.mrf.mxu0
  %v86 = vadd.f32 %v54, %v85
  %87 = vmatmul.f32.gmra.mxu0 %v25
  %v88 = vpop.f32.mrf.mxu0
  %v89 = vadd.f32 %v54, %v88
  %90 = vmatmul.f32.gmra.mxu0 %v26
  %v91 = vpop.f32.mrf.mxu0
  %v92 = vadd.f32 %v54, %v91
  %93 = vmatmul.f32.gmra.mxu0 %v27
  %v94 = vpop.f32.mrf.mxu0
  %v95 = vadd.f32 %v54, %v94
  %96 = vmatmul.f32.gmra.mxu0 %v28
  %v97 = vpop.f32.mrf.mxu0
  %v98 = vadd.f32 %v54, %v97
  %99 = vmatmul.f32.gmra.mxu0 %v29
  %v100 = vpop.f32.mrf.mxu0
  %v101 = vadd.f32 %v54, %v100
  %102 = vmatmul.f32.gmra.mxu0 %v30
  %v103 = vpop.f32.mrf.mxu0
  %v104 = vadd.f32 %v54, %v103
  %105 = vmatmul.f32.gmra.mxu0 %v31
  %v106 = vpop.f32.mrf.mxu0
  %v107 = vadd.f32 %v54, %v106
  %108 = vmatmul.f32.gmra.mxu0 %v32
  %v109 = vpop.f32.mrf.mxu0
  %v110 = vadd.f32 %v54, %v109
  %111 = vmatmul.f32.gmra.mxu0 %v33
  %v112 = vpop.f32.mrf.mxu0
  %v113 = vadd.f32 %v54, %v112
  %114 = vmatmul.f32.gmra.mxu0 %v34
  %v115 = vpop.f32.mrf.mxu0
  %v116 = vadd.f32 %v54, %v115
  %117 = vmatmul.f32.gmra.mxu0 %v35
  %v118 = vpop.f32.mrf.mxu0
  %v119 = vadd.f32 %v54, %v118
  %120 = vdwg.mxu0
  %v121 = vmul.f32 %v74, %v74
  %v122 = vmul.f32 %v77, %v77
  %v123 = vmul.f32 %v80, %v80
  %v124 = vmul.f32 %v83, %v83
  %v125 = vmul.f32 %v86, %v86
  %v126 = vmul.f32 %v89, %v89
  %v127 = vmul.f32 %v92, %v92
  %v128 = vmul.f32 %v95, %v95
  %v129 = vmul.f32 %v98, %v98
  %v130 = vmul.f32 %v101, %v101
  %v131 = vmul.f32 %v104, %v104
  %v132 = vmul.f32 %v107, %v107
  %v133 = vmul.f32 %v110, %v110
  %v134 = vmul.f32 %v113, %v113
  %v135 = vmul.f32 %v116, %v116
  %v136 = vmul.f32 %v119, %v119
  %v137 = vmul.f32 %v74, %v121
  %v138 = vmul.f32 %v77, %v122
  %v139 = vmul.f32 %v80, %v123
  %v140 = vmul.f32 %v83, %v124
  %v141 = vmul.f32 %v86, %v125
  %v142 = vmul.f32 %v89, %v126
  %v143 = vmul.f32 %v92, %v127
  %v144 = vmul.f32 %v95, %v128
  %v145 = vmul.f32 %v98, %v129
  %v146 = vmul.f32 %v101, %v130
  %v147 = vmul.f32 %v104, %v131
  %v148 = vmul.f32 %v107, %v132
  %v149 = vmul.f32 %v110, %v133
  %v150 = vmul.f32 %v113, %v134
  %v151 = vmul.f32 %v116, %v135
  %v152 = vmul.f32 %v119, %v136
  %v153 = vmul.f32 %v137, 0.044715
  %v154 = vmul.f32 %v138, 0.044715
  %v155 = vmul.f32 %v139, 0.044715
  %v156 = vmul.f32 %v140, 0.044715
  %v157 = vmul.f32 %v141, 0.044715
  %v158 = vmul.f32 %v142, 0.044715
  %v159 = vmul.f32 %v143, 0.044715
  %v160 = vmul.f32 %v144, 0.044715
  %v161 = vmul.f32 %v145, 0.044715
  %v162 = vmul.f32 %v146, 0.044715
  %v163 = vmul.f32 %v147, 0.044715
  %v164 = vmul.f32 %v148, 0.044715
  %v165 = vmul.f32 %v149, 0.044715
  %v166 = vmul.f32 %v150, 0.044715
  %v167 = vmul.f32 %v151, 0.044715
  %v168 = vmul.f32 %v152, 0.044715
  %v169 = vadd.f32 %v74, %v153
  %v170 = vadd.f32 %v77, %v154
  %v171 = vadd.f32 %v80, %v155
  %v172 = vadd.f32 %v83, %v156
  %v173 = vadd.f32 %v86, %v157
  %v174 = vadd.f32 %v89, %v158
  %v175 = vadd.f32 %v92, %v159
  %v176 = vadd.f32 %v95, %v160
  %v177 = vadd.f32 %v98, %v161
  %v178 = vadd.f32 %v101, %v162
  %v179 = vadd.f32 %v104, %v163
  %v180 = vadd.f32 %v107, %v164
  %v181 = vadd.f32 %v110, %v165
  %v182 = vadd.f32 %v113, %v166
  %v183 = vadd.f32 %v116, %v167
  %v184 = vadd.f32 %v119, %v168
  %v185 = vmul.f32 %v169, 0.7978846
  %v186 = vmul.f32 %v170, 0.7978846
  %v187 = vmul.f32 %v171, 0.7978846
  %v188 = vmul.f32 %v172, 0.7978846
  %v189 = vmul.f32 %v173, 0.7978846
  %v190 = vmul.f32 %v174, 0.7978846
  %v191 = vmul.f32 %v175, 0.7978846
  %v192 = vmul.f32 %v176, 0.7978846
  %v193 = vmul.f32 %v177, 0.7978846
  %v194 = vmul.f32 %v178, 0.7978846
  %v195 = vmul.f32 %v179, 0.7978846
  %v196 = vmul.f32 %v180, 0.7978846
  %v197 = vmul.f32 %v181, 0.7978846
  %v198 = vmul.f32 %v182, 0.7978846
  %v199 = vmul.f32 %v183, 0.7978846
  %v200 = vmul.f32 %v184, 0.7978846
  %v201 = vtanh.pop %v185
  %v202 = vtanh.pop %v186
  %v203 = vtanh.pop %v187
  %v204 = vtanh.pop %v188
  %v205 = vtanh.pop %v189
  %v206 = vtanh.pop %v190
  %v207 = vtanh.pop %v191
  %v208 = vtanh.pop %v192
  %v209 = vtanh.pop %v193
  %v210 = vtanh.pop %v194
  %v211 = vtanh.pop %v195
  %v212 = vtanh.pop %v196
  %v213 = vtanh.pop %v197
  %v214 = vtanh.pop %v198
  %v215 = vtanh.pop %v199
  %v216 = vtanh.pop %v200
  %v217 = vadd.f32 %v201, 1.0
  %v218 = vadd.f32 %v202, 1.0
  %v219 = vadd.f32 %v203, 1.0
  %v220 = vadd.f32 %v204, 1.0
  %v221 = vadd.f32 %v205, 1.0
  %v222 = vadd.f32 %v206, 1.0
  %v223 = vadd.f32 %v207, 1.0
  %v224 = vadd.f32 %v208, 1.0
  %v225 = vadd.f32 %v209, 1.0
  %v226 = vadd.f32 %v210, 1.0
  %v227 = vadd.f32 %v211, 1.0
  %v228 = vadd.f32 %v212, 1.0
  %v229 = vadd.f32 %v213, 1.0
  %v230 = vadd.f32 %v214, 1.0
  %v231 = vadd.f32 %v215, 1.0
  %v232 = vadd.f32 %v216, 1.0
  %v233 = vmul.f32 %v217, 0.5
  %v234 = vmul.f32 %v218, 0.5
  %v235 = vmul.f32 %v219, 0.5
  %v236 = vmul.f32 %v220, 0.5
  %v237 = vmul.f32 %v221, 0.5
  %v238 = vmul.f32 %v222, 0.5
  %v239 = vmul.f32 %v223, 0.5
  %v240 = vmul.f32 %v224, 0.5
  %v241 = vmul.f32 %v225, 0.5
  %v242 = vmul.f32 %v226, 0.5
  %v243 = vmul.f32 %v227, 0.5
  %v244 = vmul.f32 %v228, 0.5
  %v245 = vmul.f32 %v229, 0.5
  %v246 = vmul.f32 %v230, 0.5
  %v247 = vmul.f32 %v231, 0.5
  %v248 = vmul.f32 %v232, 0.5
  %v249 = vmul.f32 %v74, %v233
  %v250 = vmul.f32 %v77, %v234
  %v251 = vmul.f32 %v80, %v235
  %v252 = vmul.f32 %v83, %v236
  %v253 = vmul.f32 %v86, %v237
  %v254 = vmul.f32 %v89, %v238
  %v255 = vmul.f32 %v92, %v239
  %v256 = vmul.f32 %v95, %v240
  %v257 = vmul.f32 %v98, %v241
  %v258 = vmul.f32 %v101, %v242
  %v259 = vmul.f32 %v104, %v243
  %v260 = vmul.f32 %v107, %v244
  %v261 = vmul.f32 %v110, %v245
  %v262 = vmul.f32 %v113, %v246
  %v263 = vmul.f32 %v116, %v247
  %v264 = vmul.f32 %v119, %v248
  %v265 = vld [vmem:[%s3] sm:$0xff]
  %v266 = vld [vmem:[%s3 + $0x8] sm:$0xff]
  %v267 = vld [vmem:[%s3 + $0x10] sm:$0xff]
  %v268 = vld [vmem:[%s3 + $0x18] sm:$0xff]
  %v269 = vld [vmem:[%s3 + $0x20] sm:$0xff]
  %v270 = vld [vmem:[%s3 + $0x28] sm:$0xff]
  %v271 = vld [vmem:[%s3 + $0x30] sm:$0xff]
  %v272 = vld [vmem:[%s3 + $0x38] sm:$0xff]
  %v273 = vld [vmem:[%s3 + $0x40] sm:$0xff]
  %v274 = vld [vmem:[%s3 + $0x48] sm:$0xff]
  %v275 = vld [vmem:[%s3 + $0x50] sm:$0xff]
  %v276 = vld [vmem:[%s3 + $0x58] sm:$0xff]
  %v277 = vld [vmem:[%s3 + $0x60] sm:$0xff]
  %v278 = vld [vmem:[%s3 + $0x68] sm:$0xff]
  %v279 = vld [vmem:[%s3 + $0x70] sm:$0xff]
  %v280 = vld [vmem:[%s3 + $0x78] sm:$0xff]
  %281 = vmatpush.msra.mxu0 %v280
  %282 = vmatpush.msra.mxu0 %v279
  %283 = vmatpush.msra.mxu0 %v278
  %284 = vmatpush.msra.mxu0 %v277
  %285 = vmatpush.msra.mxu0 %v276
  %286 = vmatpush.msra.mxu0 %v275
  %287 = vmatpush.msra.mxu0 %v274
  %288 = vmatpush.msra.mxu0 %v273
  %289 = vmatpush.msra.mxu0 %v272
  %290 = vmatpush.msra.mxu0 %v271
  %291 = vmatpush.msra.mxu0 %v270
  %292 = vmatpush.msra.mxu0 %v269
  %293 = vmatpush.msra.mxu0 %v268
  %294 = vmatpush.msra.mxu0 %v267
  %295 = vmatpush.msra.mxu0 %v266
  %296 = vmatpush.msra.mxu0 %v265
  %297 = vmatmul.f32.gmra.mxu0 %v249
  %v298 = vpop.f32.mrf.mxu0
  %v299 = vadd.f32 0.0, %v298
  %300 = vmatmul.f32.gmra.mxu0 %v250
  %v301 = vpop.f32.mrf.mxu0
  %v302 = vadd.f32 0.0, %v301
  %303 = vmatmul.f32.gmra.mxu0 %v251
  %v304 = vpop.f32.mrf.mxu0
  %v305 = vadd.f32 0.0, %v304
  %306 = vmatmul.f32.gmra.mxu0 %v252
  %v307 = vpop.f32.mrf.mxu0
  %v308 = vadd.f32 0.0, %v307
  %309 = vmatmul.f32.gmra.mxu0 %v253
  %v310 = vpop.f32.mrf.mxu0
  %v311 = vadd.f32 0.0, %v310
  %312 = vmatmul.f32.gmra.mxu0 %v254
  %v313 = vpop.f32.mrf.mxu0
  %v314 = vadd.f32 0.0, %v313
  %315 = vmatmul.f32.gmra.mxu0 %v255
  %v316 = vpop.f32.mrf.mxu0
  %v317 = vadd.f32 0.0, %v316
  %318 = vmatmul.f32.gmra.mxu0 %v256
  %v319 = vpop.f32.mrf.mxu0
  %v320 = vadd.f32 0.0, %v319
  %321 = vmatmul.f32.gmra.mxu0 %v257
  %v322 = vpop.f32.mrf.mxu0
  %v323 = vadd.f32 0.0, %v322
  %324 = vmatmul.f32.gmra.mxu0 %v258
  %v325 = vpop.f32.mrf.mxu0
  %v326 = vadd.f32 0.0, %v325
  %327 = vmatmul.f32.gmra.mxu0 %v259
  %v328 = vpop.f32.mrf.mxu0
  %v329 = vadd.f32 0.0, %v328
  %330 = vmatmul.f32.gmra.mxu0 %v260
  %v331 = vpop.f32.mrf.mxu0
  %v332 = vadd.f32 0.0, %v331
  %333 = vmatmul.f32.gmra.mxu0 %v261
  %v334 = vpop.f32.mrf.mxu0
  %v335 = vadd.f32 0.0, %v334
  %336 = vmatmul.f32.gmra.mxu0 %v262
  %v337 = vpop.f32.mrf.mxu0
  %v338 = vadd.f32 0.0, %v337
  %339 = vmatmul.f32.gmra.mxu0 %v263
  %v340 = vpop.f32.mrf.mxu0
  %v341 = vadd.f32 0.0, %v340
  %342 = vmatmul.f32.gmra.mxu0 %v264
  %v343 = vpop.f32.mrf.mxu0
  %v344 = vadd.f32 0.0, %v343
  %345 = vdwg.mxu0
  %p346 = scmp.eq.s32.totalorder 0, 0
  // Predicated region
  $region22: #{_chunked_ffn.1} parent=0 // pred_check
    %p347 = pneg %p346
  $region23: #{_chunked_ffn.1} parent=0 // pred_check_branch
    %349 = sbr.rel (%p347) target = $region25
  $region24: #{_chunked_ffn.1} parent=0 // pred_region
    %350 = vst [vmem:[#allocation2] sm:$0xff] %v299
    %351 = vst [vmem:[#allocation2 + $0x8] sm:$0xff] %v302
    %352 = vst [vmem:[#allocation2 + $0x10] sm:$0xff] %v305
    %353 = vst [vmem:[#allocation2 + $0x18] sm:$0xff] %v308
    %354 = vst [vmem:[#allocation2 + $0x20] sm:$0xff] %v311
    %355 = vst [vmem:[#allocation2 + $0x28] sm:$0xff] %v314
    %356 = vst [vmem:[#allocation2 + $0x30] sm:$0xff] %v317
    %357 = vst [vmem:[#allocation2 + $0x38] sm:$0xff] %v320
    %358 = vst [vmem:[#allocation2 + $0x40] sm:$0xff] %v323
    %359 = vst [vmem:[#allocation2 + $0x48] sm:$0xff] %v326
    %360 = vst [vmem:[#allocation2 + $0x50] sm:$0xff] %v329
    %361 = vst [vmem:[#allocation2 + $0x58] sm:$0xff] %v332
    %362 = vst [vmem:[#allocation2 + $0x60] sm:$0xff] %v335
    %363 = vst [vmem:[#allocation2 + $0x68] sm:$0xff] %v338
    %364 = vst [vmem:[#allocation2 + $0x70] sm:$0xff] %v341
    %365 = vst [vmem:[#allocation2 + $0x78] sm:$0xff] %v344
  $region25: #{_chunked_ffn.1} parent=0 // pred_fallthru
    _
  %p366 = scmp.gt.s32.totalorder 0, 0
  // Predicated region
  $region26: #{_chunked_ffn.1} parent=0 // pred_check
    %p367 = pneg %p366
  $region27: #{_chunked_ffn.1} parent=0 // pred_check_branch
    %369 = sbr.rel (%p367) target = $region29
  $region28: #{_chunked_ffn.1} parent=0 // pred_region
    %v370 = vld [vmem:[#allocation2] sm:$0xff]
    %v371 = vld [vmem:[#allocation2 + $0x8] sm:$0xff]
    %v372 = vld [vmem:[#allocation2 + $0x10] sm:$0xff]
    %v373 = vld [vmem:[#allocation2 + $0x18] sm:$0xff]
    %v374 = vld [vmem:[#allocation2 + $0x20] sm:$0xff]
    %v375 = vld [vmem:[#allocation2 + $0x28] sm:$0xff]
    %v376 = vld [vmem:[#allocation2 + $0x30] sm:$0xff]
    %v377 = vld [vmem:[#allocation2 + $0x38] sm:$0xff]
    %v378 = vld [vmem:[#allocation2 + $0x40] sm:$0xff]
    %v379 = vld [vmem:[#allocation2 + $0x48] sm:$0xff]
    %v380 = vld [vmem:[#allocation2 + $0x50] sm:$0xff]
    %v381 = vld [vmem:[#allocation2 + $0x58] sm:$0xff]
    %v382 = vld [vmem:[#allocation2 + $0x60] sm:$0xff]
    %v383 = vld [vmem:[#allocation2 + $0x68] sm:$0xff]
    %v384 = vld [vmem:[#allocation2 + $0x70] sm:$0xff]
    %v385 = vld [vmem:[#allocation2 + $0x78] sm:$0xff]
    %v386 = vadd.f32 %v370, %v299
    %v387 = vadd.f32 %v371, %v302
    %v388 = vadd.f32 %v372, %v305
    %v389 = vadd.f32 %v373, %v308
    %v390 = vadd.f32 %v374, %v311
    %v391 = vadd.f32 %v375, %v314
    %v392 = vadd.f32 %v376, %v317
    %v393 = vadd.f32 %v377, %v320
    %v394 = vadd.f32 %v378, %v323
    %v395 = vadd.f32 %v379, %v326
    %v396 = vadd.f32 %v380, %v329
    %v397 = vadd.f32 %v381, %v332
    %v398 = vadd.f32 %v382, %v335
    %v399 = vadd.f32 %v383, %v338
    %v400 = vadd.f32 %v384, %v341
    %v401 = vadd.f32 %v385, %v344
    %402 = vst [vmem:[#allocation2] sm:$0xff] %v386
    %403 = vst [vmem:[#allocation2 + $0x8] sm:$0xff] %v387
    %404 = vst [vmem:[#allocation2 + $0x10] sm:$0xff] %v388
    %405 = vst [vmem:[#allocation2 + $0x18] sm:$0xff] %v389
    %406 = vst [vmem:[#allocation2 + $0x20] sm:$0xff] %v390
    %407 = vst [vmem:[#allocation2 + $0x28] sm:$0xff] %v391
    %408 = vst [vmem:[#allocation2 + $0x30] sm:$0xff] %v392
    %409 = vst [vmem:[#allocation2 + $0x38] sm:$0xff] %v393
    %410 = vst [vmem:[#allocation2 + $0x40] sm:$0xff] %v394
    %411 = vst [vmem:[#allocation2 + $0x48] sm:$0xff] %v395
    %412 = vst [vmem:[#allocation2 + $0x50] sm:$0xff] %v396
    %413 = vst [vmem:[#allocation2 + $0x58] sm:$0xff] %v397
    %414 = vst [vmem:[#allocation2 + $0x60] sm:$0xff] %v398
    %415 = vst [vmem:[#allocation2 + $0x68] sm:$0xff] %v399
    %416 = vst [vmem:[#allocation2 + $0x70] sm:$0xff] %v400
    %417 = vst [vmem:[#allocation2 + $0x78] sm:$0xff] %v401
  $region29: #{_chunked_ffn.1} parent=0 // pred_fallthru
    _
  // Predicated region
  $region30: #{_chunked_ffn.1} parent=0 // pred_check
    %p418 = pneg %p346
  $region31: #{_chunked_ffn.1} parent=0 // pred_check_branch
    %420 = sbr.rel (%p418) target = $region33
  $region32: #{_chunked_ffn.1} parent=0 // pred_region
    %v421 = vld [vmem:[#allocation2] sm:$0xff]
    %v422 = vld [vmem:[#allocation2 + $0x8] sm:$0xff]
    %v423 = vld [vmem:[#allocation2 + $0x10] sm:$0xff]
    %v424 = vld [vmem:[#allocation2 + $0x18] sm:$0xff]
    %v425 = vld [vmem:[#allocation2 + $0x20] sm:$0xff]
    %v426 = vld [vmem:[#allocation2 + $0x28] sm:$0xff]
    %v427 = vld [vmem:[#allocation2 + $0x30] sm:$0xff]
    %v428 = vld [vmem:[#allocation2 + $0x38] sm:$0xff]
    %v429 = vld [vmem:[#allocation2 + $0x40] sm:$0xff]
    %v430 = vld [vmem:[#allocation2 + $0x48] sm:$0xff]
    %v431 = vld [vmem:[#allocation2 + $0x50] sm:$0xff]
    %v432 = vld [vmem:[#allocation2 + $0x58] sm:$0xff]
    %v433 = vld [vmem:[#allocation2 + $0x60] sm:$0xff]
    %v434 = vld [vmem:[#allocation2 + $0x68] sm:$0xff]
    %v435 = vld [vmem:[#allocation2 + $0x70] sm:$0xff]
    %v436 = vld [vmem:[#allocation2 + $0x78] sm:$0xff]
    %v437 = vld [vmem:[%s4] sm:$0x1]
    %v439 = vperm.slane %v437, 0
    %v441 = vadd.f32 %v421, %v439
    %v442 = vadd.f32 %v422, %v439
    %v443 = vadd.f32 %v423, %v439
    %v444 = vadd.f32 %v424, %v439
    %v445 = vadd.f32 %v425, %v439
    %v446 = vadd.f32 %v426, %v439
    %v447 = vadd.f32 %v427, %v439
    %v448 = vadd.f32 %v428, %v439
    %v449 = vadd.f32 %v429, %v439
    %v450 = vadd.f32 %v430, %v439
    %v451 = vadd.f32 %v431, %v439
    %v452 = vadd.f32 %v432, %v439
    %v453 = vadd.f32 %v433, %v439
    %v454 = vadd.f32 %v434, %v439
    %v455 = vadd.f32 %v435, %v439
    %v456 = vadd.f32 %v436, %v439
    %457 = vst [vmem:[%s5] sm:$0xff] %v441
    %458 = vst [vmem:[%s5 + $0x8] sm:$0xff] %v442
    %459 = vst [vmem:[%s5 + $0x10] sm:$0xff] %v443
    %460 = vst [vmem:[%s5 + $0x18] sm:$0xff] %v444
    %461 = vst [vmem:[%s5 + $0x20] sm:$0xff] %v445
    %462 = vst [vmem:[%s5 + $0x28] sm:$0xff] %v446
    %463 = vst [vmem:[%s5 + $0x30] sm:$0xff] %v447
    %464 = vst [vmem:[%s5 + $0x38] sm:$0xff] %v448
    %465 = vst [vmem:[%s5 + $0x40] sm:$0xff] %v449
    %466 = vst [vmem:[%s5 + $0x48] sm:$0xff] %v450
    %467 = vst [vmem:[%s5 + $0x50] sm:$0xff] %v451
    %468 = vst [vmem:[%s5 + $0x58] sm:$0xff] %v452
    %469 = vst [vmem:[%s5 + $0x60] sm:$0xff] %v453
    %470 = vst [vmem:[%s5 + $0x68] sm:$0xff] %v454
    %471 = vst [vmem:[%s5 + $0x70] sm:$0xff] %v455
    %472 = vst [vmem:[%s5 + $0x78] sm:$0xff] %v456
  $region33: #{_chunked_ffn.1} parent=0 // pred_fallthru
    _
  // Predicated region
  $region34: #{_chunked_ffn.1} parent=0 // pred_check
    _
  $region35: #{_chunked_ffn.1} parent=0 // pred_check_branch
    %474 = sbr.rel (0) target = $region37
  $region36: #{_chunked_ffn.1} parent=0 // pred_region
    _
  $region37: #{_chunked_ffn.1} parent=0 // pred_fallthru
    _
  // Predicated region
  $region38: #{_chunked_ffn.1} parent=0 // pred_check
    _
  $region39: #{_chunked_ffn.1} parent=0 // pred_check_branch
    %476 = sbr.rel (0) target = $region41
  $region40: #{_chunked_ffn.1} parent=0 // pred_region
    _
  $region41: #{_chunked_ffn.1} parent=0 // pred_fallthru
    _

// kernel: _chunked_ffn.1
$region0: #{_chunked_ffn.1}
  #allocation0 [shape = 'u32[]', space=smem, size = 0x4, offset = 0x4, fixed_abs, tag = 'smem constant byte address 0x4 - core index']
  #allocation1 [shape = 'u32[72,128]{1,0:T(1,128)}', space=vmem, size = 0x9000, scoped, tag = 'internal scratch']
  #allocation2 [shape = 'f32[128,128]{1,0:T(8,128)}', space=vmem, size = 0x10000, scoped, tag = 'scratch operand']
  %s0 = inlined_call_operand.vmem [shape: f32[128,128], index: 0, kind: input, shape index: {}]
  %s1 = inlined_call_operand.vmem [shape: f32[128,128], index: 1, kind: input, shape index: {}]
  %s2 = inlined_call_operand.vmem [shape: f32[1,128], index: 2, kind: input, shape index: {}]
  %s3 = inlined_call_operand.vmem [shape: f32[128,128], index: 3, kind: input, shape index: {}]
  %s4 = inlined_call_operand.vmem [shape: f32[1,128], index: 4, kind: input, shape index: {}]
  %s5 = inlined_call_operand.vmem [shape: f32[128,128], index: 5, kind: output, shape index: {}]
  %s6 = sld [smem:[#allocation0]]
  $region42: #{_chunked_ffn.1} parent=0
    _
  %s8 = ssub.s32 1, %s6
  %s9 = scalar_select 0, %s8, %s6
  // Predicated region
  $region2: #{_chunked_ffn.1} parent=0 // pred_check
    _
  $region3: #{_chunked_ffn.1} parent=0 // pred_check_branch
    %11 = sbr.rel (0) target = $region5
  $region4: #{_chunked_ffn.1} parent=0 // pred_region
    _
  $region5: #{_chunked_ffn.1} parent=0 // pred_fallthru
    _
  // Predicated region
  $region6: #{_chunked_ffn.1} parent=0 // pred_check
    _
  $region7: #{_chunked_ffn.1} parent=0 // pred_check_branch
    %13 = sbr.rel (0) target = $region9
  $region8: #{_chunked_ffn.1} parent=0 // pred_region
    _
  $region9: #{_chunked_ffn.1} parent=0 // pred_fallthru
    _
  // Predicated region
  $region10: #{_chunked_ffn.1} parent=0 // pred_check
    _
  $region11: #{_chunked_ffn.1} parent=0 // pred_check_branch
    %15 = sbr.rel (0) target = $region13
  $region12: #{_chunked_ffn.1} parent=0 // pred_region
    _
  $region13: #{_chunked_ffn.1} parent=0 // pred_fallthru
    _
  // Predicated region
  $region14: #{_chunked_ffn.1} parent=0 // pred_check
    _
  $region15: #{_chunked_ffn.1} parent=0 // pred_check_branch
    %17 = sbr.rel (0) target = $region17
  $region16: #{_chunked_ffn.1} parent=0 // pred_region
    _
  $region17: #{_chunked_ffn.1} parent=0 // pred_fallthru
    _
  // Predicated region
  $region18: #{_chunked_ffn.1} parent=0 // pred_check
    _
  $region19: #{_chunked_ffn.1} parent=0 // pred_check_branch
    %19 = sbr.rel (0) target = $region21
  $region20: #{_chunked_ffn.1} parent=0 // pred_region
    _
  $region21: #{_chunked_ffn.1} parent=0 // pred_fallthru
    _
  %v20 = vld [vmem:[%s0] sm:$0xff]
  %v21 = vld [vmem:[%s0 + $0x8] sm:$0xff]
  %v22 = vld [vmem:[%s0 + $0x10] sm:$0xff]
  %v23 = vld [vmem:[%s0 + $0x18] sm:$0xff]
  %v24 = vld [vmem:[%s0 + $0x20] sm:$0xff]
  %v25 = vld [vmem:[%s0 + $0x28] sm:$0xff]
  %v26 = vld [vmem:[%s0 + $0x30] sm:$0xff]
  %v27 = vld [vmem:[%s0 + $0x38] sm:$0xff]
  %v28 = vld [vmem:[%s0 + $0x40] sm:$0xff]
  %v29 = vld [vmem:[%s0 + $0x48] sm:$0xff]
  %v30 = vld [vmem:[%s0 + $0x50] sm:$0xff]
  %v31 = vld [vmem:[%s0 + $0x58] sm:$0xff]
  %v32 = vld [vmem:[%s0 + $0x60] sm:$0xff]
  %v33 = vld [vmem:[%s0 + $0x68] sm:$0xff]
  %v34 = vld [vmem:[%s0 + $0x70] sm:$0xff]
  %v35 = vld [vmem:[%s0 + $0x78] sm:$0xff]
  %v36 = vld [vmem:[%s1] sm:$0xff]
  %v37 = vld [vmem:[%s1 + $0x8] sm:$0xff]
  %v38 = vld [vmem:[%s1 + $0x10] sm:$0xff]
  %v39 = vld [vmem:[%s1 + $0x18] sm:$0xff]
  %v40 = vld [vmem:[%s1 + $0x20] sm:$0xff]
  %v41 = vld [vmem:[%s1 + $0x28] sm:$0xff]
  %v42 = vld [vmem:[%s1 + $0x30] sm:$0xff]
  %v43 = vld [vmem:[%s1 + $0x38] sm:$0xff]
  %v44 = vld [vmem:[%s1 + $0x40] sm:$0xff]
  %v45 = vld [vmem:[%s1 + $0x48] sm:$0xff]
  %v46 = vld [vmem:[%s1 + $0x50] sm:$0xff]
  %v47 = vld [vmem:[%s1 + $0x58] sm:$0xff]
  %v48 = vld [vmem:[%s1 + $0x60] sm:$0xff]
  %v49 = vld [vmem:[%s1 + $0x68] sm:$0xff]
  %v50 = vld [vmem:[%s1 + $0x70] sm:$0xff]
  %v51 = vld [vmem:[%s1 + $0x78] sm:$0xff]
  %v52 = vld [vmem:[%s2] sm:$0x1]
  %v54 = vperm.slane %v52, 0
  %56 = vmatpush.msra.mxu0 %v51
  %57 = vmatpush.msra.mxu0 %v50
  %58 = vmatpush.msra.mxu0 %v49
  %59 = vmatpush.msra.mxu0 %v48
  %60 = vmatpush.msra.mxu0 %v47
  %61 = vmatpush.msra.mxu0 %v46
  %62 = vmatpush.msra.mxu0 %v45
  %63 = vmatpush.msra.mxu0 %v44
  %64 = vmatpush.msra.mxu0 %v43
  %65 = vmatpush.msra.mxu0 %v42
  %66 = vmatpush.msra.mxu0 %v41
  %67 = vmatpush.msra.mxu0 %v40
  %68 = vmatpush.msra.mxu0 %v39
  %69 = vmatpush.msra.mxu0 %v38
  %70 = vmatpush.msra.mxu0 %v37
  %71 = vmatpush.msra.mxu0 %v36
  %72 = vmatmul.f32.gmra.mxu0 %v20
  %v73 = vpop.f32.mrf.mxu0
  %v74 = vadd.f32 %v54, %v73
  %75 = vmatmul.f32.gmra.mxu0 %v21
  %v76 = vpop.f32.mrf.mxu0
  %v77 = vadd.f32 %v54, %v76
  %78 = vmatmul.f32.gmra.mxu0 %v22
  %v79 = vpop.f32.mrf.mxu0
  %v80 = vadd.f32 %v54, %v79
  %81 = vmatmul.f32.gmra.mxu0 %v23
  %v82 = vpop.f32.mrf.mxu0
  %v83 = vadd.f32 %v54, %v82
  %84 = vmatmul.f32.gmra.mxu0 %v24
  %v85 = vpop.f32.mrf.mxu0
  %v86 = vadd.f32 %v54, %v85
  %87 = vmatmul.f32.gmra.mxu0 %v25
  %v88 = vpop.f32.mrf.mxu0
  %v89 = vadd.f32 %v54, %v88
  %90 = vmatmul.f32.gmra.mxu0 %v26
  %v91 = vpop.f32.mrf.mxu0
  %v92 = vadd.f32 %v54, %v91
  %93 = vmatmul.f32.gmra.mxu0 %v27
  %v94 = vpop.f32.mrf.mxu0
  %v95 = vadd.f32 %v54, %v94
  %96 = vmatmul.f32.gmra.mxu0 %v28
  %v97 = vpop.f32.mrf.mxu0
  %v98 = vadd.f32 %v54, %v97
  %99 = vmatmul.f32.gmra.mxu0 %v29
  %v100 = vpop.f32.mrf.mxu0
  %v101 = vadd.f32 %v54, %v100
  %102 = vmatmul.f32.gmra.mxu0 %v30
  %v103 = vpop.f32.mrf.mxu0
  %v104 = vadd.f32 %v54, %v103
  %105 = vmatmul.f32.gmra.mxu0 %v31
  %v106 = vpop.f32.mrf.mxu0
  %v107 = vadd.f32 %v54, %v106
  %108 = vmatmul.f32.gmra.mxu0 %v32
  %v109 = vpop.f32.mrf.mxu0
  %v110 = vadd.f32 %v54, %v109
  %111 = vmatmul.f32.gmra.mxu0 %v33
  %v112 = vpop.f32.mrf.mxu0
  %v113 = vadd.f32 %v54, %v112
  %114 = vmatmul.f32.gmra.mxu0 %v34
  %v115 = vpop.f32.mrf.mxu0
  %v116 = vadd.f32 %v54, %v115
  %117 = vmatmul.f32.gmra.mxu0 %v35
  %v118 = vpop.f32.mrf.mxu0
  %v119 = vadd.f32 %v54, %v118
  %120 = vdwg.mxu0
  %v121 = vmul.f32 %v74, %v74
  %v122 = vmul.f32 %v77, %v77
  %v123 = vmul.f32 %v80, %v80
  %v124 = vmul.f32 %v83, %v83
  %v125 = vmul.f32 %v86, %v86
  %v126 = vmul.f32 %v89, %v89
  %v127 = vmul.f32 %v92, %v92
  %v128 = vmul.f32 %v95, %v95
  %v129 = vmul.f32 %v98, %v98
  %v130 = vmul.f32 %v101, %v101
  %v131 = vmul.f32 %v104, %v104
  %v132 = vmul.f32 %v107, %v107
  %v133 = vmul.f32 %v110, %v110
  %v134 = vmul.f32 %v113, %v113
  %v135 = vmul.f32 %v116, %v116
  %v136 = vmul.f32 %v119, %v119
  %v137 = vmul.f32 %v74, %v121
  %v138 = vmul.f32 %v77, %v122
  %v139 = vmul.f32 %v80, %v123
  %v140 = vmul.f32 %v83, %v124
  %v141 = vmul.f32 %v86, %v125
  %v142 = vmul.f32 %v89, %v126
  %v143 = vmul.f32 %v92, %v127
  %v144 = vmul.f32 %v95, %v128
  %v145 = vmul.f32 %v98, %v129
  %v146 = vmul.f32 %v101, %v130
  %v147 = vmul.f32 %v104, %v131
  %v148 = vmul.f32 %v107, %v132
  %v149 = vmul.f32 %v110, %v133
  %v150 = vmul.f32 %v113, %v134
  %v151 = vmul.f32 %v116, %v135
  %v152 = vmul.f32 %v119, %v136
  %v153 = vmul.f32 %v137, 0.044715
  %v154 = vmul.f32 %v138, 0.044715
  %v155 = vmul.f32 %v139, 0.044715
  %v156 = vmul.f32 %v140, 0.044715
  %v157 = vmul.f32 %v141, 0.044715
  %v158 = vmul.f32 %v142, 0.044715
  %v159 = vmul.f32 %v143, 0.044715
  %v160 = vmul.f32 %v144, 0.044715
  %v161 = vmul.f32 %v145, 0.044715
  %v162 = vmul.f32 %v146, 0.044715
  %v163 = vmul.f32 %v147, 0.044715
  %v164 = vmul.f32 %v148, 0.044715
  %v165 = vmul.f32 %v149, 0.044715
  %v166 = vmul.f32 %v150, 0.044715
  %v167 = vmul.f32 %v151, 0.044715
  %v168 = vmul.f32 %v152, 0.044715
  %v169 = vadd.f32 %v74, %v153
  %v170 = vadd.f32 %v77, %v154
  %v171 = vadd.f32 %v80, %v155
  %v172 = vadd.f32 %v83, %v156
  %v173 = vadd.f32 %v86, %v157
  %v174 = vadd.f32 %v89, %v158
  %v175 = vadd.f32 %v92, %v159
  %v176 = vadd.f32 %v95, %v160
  %v177 = vadd.f32 %v98, %v161
  %v178 = vadd.f32 %v101, %v162
  %v179 = vadd.f32 %v104, %v163
  %v180 = vadd.f32 %v107, %v164
  %v181 = vadd.f32 %v110, %v165
  %v182 = vadd.f32 %v113, %v166
  %v183 = vadd.f32 %v116, %v167
  %v184 = vadd.f32 %v119, %v168
  %v185 = vmul.f32 %v169, 0.7978846
  %v186 = vmul.f32 %v170, 0.7978846
  %v187 = vmul.f32 %v171, 0.7978846
  %v188 = vmul.f32 %v172, 0.7978846
  %v189 = vmul.f32 %v173, 0.7978846
  %v190 = vmul.f32 %v174, 0.7978846
  %v191 = vmul.f32 %v175, 0.7978846
  %v192 = vmul.f32 %v176, 0.7978846
  %v193 = vmul.f32 %v177, 0.7978846
  %v194 = vmul.f32 %v178, 0.7978846
  %v195 = vmul.f32 %v179, 0.7978846
  %v196 = vmul.f32 %v180, 0.7978846
  %v197 = vmul.f32 %v181, 0.7978846
  %v198 = vmul.f32 %v182, 0.7978846
  %v199 = vmul.f32 %v183, 0.7978846
  %v200 = vmul.f32 %v184, 0.7978846
  %v201 = vtanh.pop %v185
  %v202 = vtanh.pop %v186
  %v203 = vtanh.pop %v187
  %v204 = vtanh.pop %v188
  %v205 = vtanh.pop %v189
  %v206 = vtanh.pop %v190
  %v207 = vtanh.pop %v191
  %v208 = vtanh.pop %v192
  %v209 = vtanh.pop %v193
  %v210 = vtanh.pop %v194
  %v211 = vtanh.pop %v195
  %v212 = vtanh.pop %v196
  %v213 = vtanh.pop %v197
  %v214 = vtanh.pop %v198
  %v215 = vtanh.pop %v199
  %v216 = vtanh.pop %v200
  %v217 = vadd.f32 %v201, 1.0
  %v218 = vadd.f32 %v202, 1.0
  %v219 = vadd.f32 %v203, 1.0
  %v220 = vadd.f32 %v204, 1.0
  %v221 = vadd.f32 %v205, 1.0
  %v222 = vadd.f32 %v206, 1.0
  %v223 = vadd.f32 %v207, 1.0
  %v224 = vadd.f32 %v208, 1.0
  %v225 = vadd.f32 %v209, 1.0
  %v226 = vadd.f32 %v210, 1.0
  %v227 = vadd.f32 %v211, 1.0
  %v228 = vadd.f32 %v212, 1.0
  %v229 = vadd.f32 %v213, 1.0
  %v230 = vadd.f32 %v214, 1.0
  %v231 = vadd.f32 %v215, 1.0
  %v232 = vadd.f32 %v216, 1.0
  %v233 = vmul.f32 %v217, 0.5
  %v234 = vmul.f32 %v218, 0.5
  %v235 = vmul.f32 %v219, 0.5
  %v236 = vmul.f32 %v220, 0.5
  %v237 = vmul.f32 %v221, 0.5
  %v238 = vmul.f32 %v222, 0.5
  %v239 = vmul.f32 %v223, 0.5
  %v240 = vmul.f32 %v224, 0.5
  %v241 = vmul.f32 %v225, 0.5
  %v242 = vmul.f32 %v226, 0.5
  %v243 = vmul.f32 %v227, 0.5
  %v244 = vmul.f32 %v228, 0.5
  %v245 = vmul.f32 %v229, 0.5
  %v246 = vmul.f32 %v230, 0.5
  %v247 = vmul.f32 %v231, 0.5
  %v248 = vmul.f32 %v232, 0.5
  %v249 = vmul.f32 %v74, %v233
  %v250 = vmul.f32 %v77, %v234
  %v251 = vmul.f32 %v80, %v235
  %v252 = vmul.f32 %v83, %v236
  %v253 = vmul.f32 %v86, %v237
  %v254 = vmul.f32 %v89, %v238
  %v255 = vmul.f32 %v92, %v239
  %v256 = vmul.f32 %v95, %v240
  %v257 = vmul.f32 %v98, %v241
  %v258 = vmul.f32 %v101, %v242
  %v259 = vmul.f32 %v104, %v243
  %v260 = vmul.f32 %v107, %v244
  %v261 = vmul.f32 %v110, %v245
  %v262 = vmul.f32 %v113, %v246
  %v263 = vmul.f32 %v116, %v247
  %v264 = vmul.f32 %v119, %v248
  %v265 = vld [vmem:[%s3] sm:$0xff]
  %v266 = vld [vmem:[%s3 + $0x8] sm:$0xff]
  %v267 = vld [vmem:[%s3 + $0x10] sm:$0xff]
  %v268 = vld [vmem:[%s3 + $0x18] sm:$0xff]
  %v269 = vld [vmem:[%s3 + $0x20] sm:$0xff]
  %v270 = vld [vmem:[%s3 + $0x28] sm:$0xff]
  %v271 = vld [vmem:[%s3 + $0x30] sm:$0xff]
  %v272 = vld [vmem:[%s3 + $0x38] sm:$0xff]
  %v273 = vld [vmem:[%s3 + $0x40] sm:$0xff]
  %v274 = vld [vmem:[%s3 + $0x48] sm:$0xff]
  %v275 = vld [vmem:[%s3 + $0x50] sm:$0xff]
  %v276 = vld [vmem:[%s3 + $0x58] sm:$0xff]
  %v277 = vld [vmem:[%s3 + $0x60] sm:$0xff]
  %v278 = vld [vmem:[%s3 + $0x68] sm:$0xff]
  %v279 = vld [vmem:[%s3 + $0x70] sm:$0xff]
  %v280 = vld [vmem:[%s3 + $0x78] sm:$0xff]
  %281 = vmatpush.msra.mxu0 %v280
  %282 = vmatpush.msra.mxu0 %v279
  %283 = vmatpush.msra.mxu0 %v278
  %284 = vmatpush.msra.mxu0 %v277
  %285 = vmatpush.msra.mxu0 %v276
  %286 = vmatpush.msra.mxu0 %v275
  %287 = vmatpush.msra.mxu0 %v274
  %288 = vmatpush.msra.mxu0 %v273
  %289 = vmatpush.msra.mxu0 %v272
  %290 = vmatpush.msra.mxu0 %v271
  %291 = vmatpush.msra.mxu0 %v270
  %292 = vmatpush.msra.mxu0 %v269
  %293 = vmatpush.msra.mxu0 %v268
  %294 = vmatpush.msra.mxu0 %v267
  %295 = vmatpush.msra.mxu0 %v266
  %296 = vmatpush.msra.mxu0 %v265
  %297 = vmatmul.f32.gmra.mxu0 %v249
  %v298 = vpop.f32.mrf.mxu0
  %v299 = vadd.f32 0.0, %v298
  %300 = vmatmul.f32.gmra.mxu0 %v250
  %v301 = vpop.f32.mrf.mxu0
  %v302 = vadd.f32 0.0, %v301
  %303 = vmatmul.f32.gmra.mxu0 %v251
  %v304 = vpop.f32.mrf.mxu0
  %v305 = vadd.f32 0.0, %v304
  %306 = vmatmul.f32.gmra.mxu0 %v252
  %v307 = vpop.f32.mrf.mxu0
  %v308 = vadd.f32 0.0, %v307
  %309 = vmatmul.f32.gmra.mxu0 %v253
  %v310 = vpop.f32.mrf.mxu0
  %v311 = vadd.f32 0.0, %v310
  %312 = vmatmul.f32.gmra.mxu0 %v254
  %v313 = vpop.f32.mrf.mxu0
  %v314 = vadd.f32 0.0, %v313
  %315 = vmatmul.f32.gmra.mxu0 %v255
  %v316 = vpop.f32.mrf.mxu0
  %v317 = vadd.f32 0.0, %v316
  %318 = vmatmul.f32.gmra.mxu0 %v256
  %v319 = vpop.f32.mrf.mxu0
  %v320 = vadd.f32 0.0, %v319
  %321 = vmatmul.f32.gmra.mxu0 %v257
  %v322 = vpop.f32.mrf.mxu0
  %v323 = vadd.f32 0.0, %v322
  %324 = vmatmul.f32.gmra.mxu0 %v258
  %v325 = vpop.f32.mrf.mxu0
  %v326 = vadd.f32 0.0, %v325
  %327 = vmatmul.f32.gmra.mxu0 %v259
  %v328 = vpop.f32.mrf.mxu0
  %v329 = vadd.f32 0.0, %v328
  %330 = vmatmul.f32.gmra.mxu0 %v260
  %v331 = vpop.f32.mrf.mxu0
  %v332 = vadd.f32 0.0, %v331
  %333 = vmatmul.f32.gmra.mxu0 %v261
  %v334 = vpop.f32.mrf.mxu0
  %v335 = vadd.f32 0.0, %v334
  %336 = vmatmul.f32.gmra.mxu0 %v262
  %v337 = vpop.f32.mrf.mxu0
  %v338 = vadd.f32 0.0, %v337
  %339 = vmatmul.f32.gmra.mxu0 %v263
  %v340 = vpop.f32.mrf.mxu0
  %v341 = vadd.f32 0.0, %v340
  %342 = vmatmul.f32.gmra.mxu0 %v264
  %v343 = vpop.f32.mrf.mxu0
  %v344 = vadd.f32 0.0, %v343
  %345 = vdwg.mxu0
  %p346 = scmp.eq.s32.totalorder 0, 0
  // Predicated region
  $region22: #{_chunked_ffn.1} parent=0 // pred_check
    %p347 = pneg %p346
  $region23: #{_chunked_ffn.1} parent=0 // pred_check_branch
    %349 = sbr.rel (%p347) target = $region25
  $region24: #{_chunked_ffn.1} parent=0 // pred_region
    %350 = vst [vmem:[#allocation2] sm:$0xff] %v299
    %351 = vst [vmem:[#allocation2 + $0x8] sm:$0xff] %v302
    %352 = vst [vmem:[#allocation2 + $0x10] sm:$0xff] %v305
    %353 = vst [vmem:[#allocation2 + $0x18] sm:$0xff] %v308
    %354 = vst [vmem:[#allocation2 + $0x20] sm:$0xff] %v311
    %355 = vst [vmem:[#allocation2 + $0x28] sm:$0xff] %v314
    %356 = vst [vmem:[#allocation2 + $0x30] sm:$0xff] %v317
    %357 = vst [vmem:[#allocation2 + $0x38] sm:$0xff] %v320
    %358 = vst [vmem:[#allocation2 + $0x40] sm:$0xff] %v323
    %359 = vst [vmem:[#allocation2 + $0x48] sm:$0xff] %v326
    %360 = vst [vmem:[#allocation2 + $0x50] sm:$0xff] %v329
    %361 = vst [vmem:[#allocation2 + $0x58] sm:$0xff] %v332
    %362 = vst [vmem:[#allocation2 + $0x60] sm:$0xff] %v335
    %363 = vst [vmem:[#allocation2 + $0x68] sm:$0xff] %v338
    %364 = vst [vmem:[#allocation2 + $0x70] sm:$0xff] %v341
    %365 = vst [vmem:[#allocation2 + $0x78] sm:$0xff] %v344
  $region25: #{_chunked_ffn.1} parent=0 // pred_fallthru
    _
  %p366 = scmp.gt.s32.totalorder 0, 0
  // Predicated region
  $region26: #{_chunked_ffn.1} parent=0 // pred_check
    %p367 = pneg %p366
  $region27: #{_chunked_ffn.1} parent=0 // pred_check_branch
    %369 = sbr.rel (%p367) target = $region29
  $region28: #{_chunked_ffn.1} parent=0 // pred_region
    %v370 = vld [vmem:[#allocation2] sm:$0xff]
    %v371 = vld [vmem:[#allocation2 + $0x8] sm:$0xff]
    %v372 = vld [vmem:[#allocation2 + $0x10] sm:$0xff]
    %v373 = vld [vmem:[#allocation2 + $0x18] sm:$0xff]
    %v374 = vld [vmem:[#allocation2 + $0x20] sm:$0xff]
    %v375 = vld [vmem:[#allocation2 + $0x28] sm:$0xff]
    %v376 = vld [vmem:[#allocation2 + $0x30] sm:$0xff]
    %v377 = vld [vmem:[#allocation2 + $0x38] sm:$0xff]
    %v378 = vld [vmem:[#allocation2 + $0x40] sm:$0xff]
    %v379 = vld [vmem:[#allocation2 + $0x48] sm:$0xff]
    %v380 = vld [vmem:[#allocation2 + $0x50] sm:$0xff]
    %v381 = vld [vmem:[#allocation2 + $0x58] sm:$0xff]
    %v382 = vld [vmem:[#allocation2 + $0x60] sm:$0xff]
    %v383 = vld [vmem:[#allocation2 + $0x68] sm:$0xff]
    %v384 = vld [vmem:[#allocation2 + $0x70] sm:$0xff]
    %v385 = vld [vmem:[#allocation2 + $0x78] sm:$0xff]
    %v386 = vadd.f32 %v370, %v299
    %v387 = vadd.f32 %v371, %v302
    %v388 = vadd.f32 %v372, %v305
    %v389 = vadd.f32 %v373, %v308
    %v390 = vadd.f32 %v374, %v311
    %v391 = vadd.f32 %v375, %v314
    %v392 = vadd.f32 %v376, %v317
    %v393 = vadd.f32 %v377, %v320
    %v394 = vadd.f32 %v378, %v323
    %v395 = vadd.f32 %v379, %v326
    %v396 = vadd.f32 %v380, %v329
    %v397 = vadd.f32 %v381, %v332
    %v398 = vadd.f32 %v382, %v335
    %v399 = vadd.f32 %v383, %v338
    %v400 = vadd.f32 %v384, %v341
    %v401 = vadd.f32 %v385, %v344
    %402 = vst [vmem:[#allocation2] sm:$0xff] %v386
    %403 = vst [vmem:[#allocation2 + $0x8] sm:$0xff] %v387
    %404 = vst [vmem:[#allocation2 + $0x10] sm:$0xff] %v388
    %405 = vst [vmem:[#allocation2 + $0x18] sm:$0xff] %v389
    %406 = vst [vmem:[#allocation2 + $0x20] sm:$0xff] %v390
    %407 = vst [vmem:[#allocation2 + $0x28] sm:$0xff] %v391
    %408 = vst [vmem:[#allocation2 + $0x30] sm:$0xff] %v392
    %409 = vst [vmem:[#allocation2 + $0x38] sm:$0xff] %v393
    %410 = vst [vmem:[#allocation2 + $0x40] sm:$0xff] %v394
    %411 = vst [vmem:[#allocation2 + $0x48] sm:$0xff] %v395
    %412 = vst [vmem:[#allocation2 + $0x50] sm:$0xff] %v396
    %413 = vst [vmem:[#allocation2 + $0x58] sm:$0xff] %v397
    %414 = vst [vmem:[#allocation2 + $0x60] sm:$0xff] %v398
    %415 = vst [vmem:[#allocation2 + $0x68] sm:$0xff] %v399
    %416 = vst [vmem:[#allocation2 + $0x70] sm:$0xff] %v400
    %417 = vst [vmem:[#allocation2 + $0x78] sm:$0xff] %v401
  $region29: #{_chunked_ffn.1} parent=0 // pred_fallthru
    _
  // Predicated region
  $region30: #{_chunked_ffn.1} parent=0 // pred_check
    %p418 = pneg %p346
  $region31: #{_chunked_ffn.1} parent=0 // pred_check_branch
    %420 = sbr.rel (%p418) target = $region33
  $region32: #{_chunked_ffn.1} parent=0 // pred_region
    %v421 = vld [vmem:[#allocation2] sm:$0xff]
    %v422 = vld [vmem:[#allocation2 + $0x8] sm:$0xff]
    %v423 = vld [vmem:[#allocation2 + $0x10] sm:$0xff]
    %v424 = vld [vmem:[#allocation2 + $0x18] sm:$0xff]
    %v425 = vld [vmem:[#allocation2 + $0x20] sm:$0xff]
    %v426 = vld [vmem:[#allocation2 + $0x28] sm:$0xff]
    %v427 = vld [vmem:[#allocation2 + $0x30] sm:$0xff]
    %v428 = vld [vmem:[#allocation2 + $0x38] sm:$0xff]
    %v429 = vld [vmem:[#allocation2 + $0x40] sm:$0xff]
    %v430 = vld [vmem:[#allocation2 + $0x48] sm:$0xff]
    %v431 = vld [vmem:[#allocation2 + $0x50] sm:$0xff]
    %v432 = vld [vmem:[#allocation2 + $0x58] sm:$0xff]
    %v433 = vld [vmem:[#allocation2 + $0x60] sm:$0xff]
    %v434 = vld [vmem:[#allocation2 + $0x68] sm:$0xff]
    %v435 = vld [vmem:[#allocation2 + $0x70] sm:$0xff]
    %v436 = vld [vmem:[#allocation2 + $0x78] sm:$0xff]
    %v437 = vld [vmem:[%s4] sm:$0x1]
    %v439 = vperm.slane %v437, 0
    %v441 = vadd.f32 %v421, %v439
    %v442 = vadd.f32 %v422, %v439
    %v443 = vadd.f32 %v423, %v439
    %v444 = vadd.f32 %v424, %v439
    %v445 = vadd.f32 %v425, %v439
    %v446 = vadd.f32 %v426, %v439
    %v447 = vadd.f32 %v427, %v439
    %v448 = vadd.f32 %v428, %v439
    %v449 = vadd.f32 %v429, %v439
    %v450 = vadd.f32 %v430, %v439
    %v451 = vadd.f32 %v431, %v439
    %v452 = vadd.f32 %v432, %v439
    %v453 = vadd.f32 %v433, %v439
    %v454 = vadd.f32 %v434, %v439
    %v455 = vadd.f32 %v435, %v439
    %v456 = vadd.f32 %v436, %v439
    %457 = vst [vmem:[%s5] sm:$0xff] %v441
    %458 = vst [vmem:[%s5 + $0x8] sm:$0xff] %v442
    %459 = vst [vmem:[%s5 + $0x10] sm:$0xff] %v443
    %460 = vst [vmem:[%s5 + $0x18] sm:$0xff] %v444
    %461 = vst [vmem:[%s5 + $0x20] sm:$0xff] %v445
    %462 = vst [vmem:[%s5 + $0x28] sm:$0xff] %v446
    %463 = vst [vmem:[%s5 + $0x30] sm:$0xff] %v447
    %464 = vst [vmem:[%s5 + $0x38] sm:$0xff] %v448
    %465 = vst [vmem:[%s5 + $0x40] sm:$0xff] %v449
    %466 = vst [vmem:[%s5 + $0x48] sm:$0xff] %v450
    %467 = vst [vmem:[%s5 + $0x50] sm:$0xff] %v451
    %468 = vst [vmem:[%s5 + $0x58] sm:$0xff] %v452
    %469 = vst [vmem:[%s5 + $0x60] sm:$0xff] %v453
    %470 = vst [vmem:[%s5 + $0x68] sm:$0xff] %v454
    %471 = vst [vmem:[%s5 + $0x70] sm:$0xff] %v455
    %472 = vst [vmem:[%s5 + $0x78] sm:$0xff] %v456
  $region33: #{_chunked_ffn.1} parent=0 // pred_fallthru
    _
  // Predicated region
  $region34: #{_chunked_ffn.1} parent=0 // pred_check
    _
  $region35: #{_chunked_ffn.1} parent=0 // pred_check_branch
    %474 = sbr.rel (0) target = $region37
  $region36: #{_chunked_ffn.1} parent=0 // pred_region
    _
  $region37: #{_chunked_ffn.1} parent=0 // pred_fallthru
    _
  // Predicated region
  $region38: #{_chunked_ffn.1} parent=0 // pred_check
    _
  $region39: #{_chunked_ffn.1} parent=0 // pred_check_branch
    %476 = sbr.rel (0) target = $region41
  $region40: #{_chunked_ffn.1} parent=0 // pred_region
    _
  $region41: #{_chunked_ffn.1} parent=0 // pred_fallthru
    _

</llo_original>
